<compile_context>
chip_gen: v7x
topology: tpu7x:2x2x1
jax: 0.10.0
libtpu: 0.0.40
codegen_flags: <defaults>
</compile_context>

<pallas_src>
import functools

import jax
import jax.numpy as jnp
from jax import lax
from jax.experimental import pallas as pl
from jax.experimental.pallas import tpu as pltpu

_LANE = 128       # vreg lane width  -> last-dim padding
_SUBLANE = 16     # bf16 sublane packing (also multiple of f32 sublane 8)
_T_BLK_CAP = 256  # raised per perf review; VMEM budget still binds


def _round_up(n, m):
    return ((n + m - 1) // m) * m


def _vmem_budget_bytes():
    """Generation-aware VMEM budget: ~5/8 of per-core VMEM, capped at 96 MiB."""
    cap = 0
    try:
        info = pltpu.get_tpu_info()
        cap = int(getattr(info, "vmem_capacity_bytes", 0) or 0)
    except Exception:
        cap = 0
    if cap <= 0:
        cap = 64 * 1024 * 1024          # conservative fallback (v7x per-core physical)
    return min((cap * 5) // 8, 96 * 1024 * 1024)


def _choose_t_blk(seq_len, b_blk, ip, hp, budget, cap, w_bytes):
    """Pick a time-chunk size whose pipelined blocks fit the VMEM budget."""
    per_t = (2 * b_blk * ip * w_bytes    # x chunk, double-buffered
             + 2 * b_blk * hp * 4        # out chunk (<= f32), double-buffered
             + b_blk * hp * 4)           # z scratch (f32)
    resident = (2 * (ip * hp + hp * hp) * w_bytes   # weights (double-buffered)
                + 2 * hp * 4 * 2                    # bias
                + 2 * b_blk * hp * 4)               # h carry + resident last-step out
    avail = (budget * 3) // 4 - resident
    t_max = int(max(1, min(cap, avail // max(per_t, 1))))
    if seq_len <= t_max:
        return int(seq_len)
    n_chunks = -(-seq_len // t_max)                      # cdiv
    t_blk = _round_up(-(-seq_len // n_chunks), 8)        # balanced chunks, low padding
    return int(max(1, min(t_max, t_blk)))


def _rnn_layer_kernel(x_ref, wih_ref, whh_ref, b_ref, out_ref, h_ref, z_ref,
                      *, t_blk, seq_len, last_only, needs_mask, unroll):
    """One (batch-block, time-chunk) grid step of a tanh RNN layer.

    x_ref  : (T_BLK, Bblk, Ip)  bf16 input chunk (time-major)
    wih_ref: (Ip, Hp)           input->hidden weight (transposed), resident
    whh_ref: (Hp, Hp)           hidden->hidden weight (transposed), resident
    b_ref  : (1, Hp)            f32 combined bias (b_ih + b_hh)
    out_ref: (T_BLK, Bblk, Hp) or (Bblk, Hp)  full sequence or last-step only
    h_ref  : (Bblk, Hp) f32 VMEM scratch -- hidden state carried across chunks
    z_ref  : (T_BLK, Bblk, Hp) f32 VMEM scratch -- precomputed input projection
    """
    t_chunk = pl.program_id(1)
    last_chunk = t_chunk == pl.num_programs(1) - 1

    @pl.when(t_chunk == 0)
    def _init():
        h_ref[...] = jnp.zeros_like(h_ref)

    tb, bb, ip = x_ref.shape
    hp = whh_ref.shape[1]

    # Hoisted input projection: one big (T_BLK*Bblk, Ip) x (Ip, Hp) MXU matmul for
    # the whole chunk; bias added once per chunk (not per step).
    x2d = x_ref[...].reshape(tb * bb, ip)
    z2d = jnp.dot(x2d, wih_ref[...], preferred_element_type=jnp.float32) + b_ref[...]
    z_ref[...] = z2d.reshape(tb, bb, hp)

    whh = whh_ref[...]

    def run_steps(masked):
        base_t = t_chunk * t_blk

        def step(i, h):
            pre = z_ref[i] + jnp.dot(h.astype(whh.dtype), whh,
                                     preferred_element_type=jnp.float32)
            h_new = jnp.tanh(pre)                      # f32 tanh on the EUP
            if masked:                                 # freeze h on padded timesteps
                h_new = jnp.where(base_t + i < seq_len, h_new, h)
            if not last_only:
                out_ref[i] = h_new.astype(out_ref.dtype)
            return h_new

        h_ref[...] = lax.fori_loop(0, t_blk, step, h_ref[...], unroll=unroll)

    if needs_mask:
        # Padded timesteps only exist in the final chunk: keep the common path free
        # of the per-step compare + select on the serial dependency chain.
        @pl.when(jnp.logical_not(last_chunk))
        def _fast():
            run_steps(False)

        @pl.when(last_chunk)
        def _masked():
            run_steps(True)
    else:
        run_steps(False)

    if last_only:
        # Constant output block index across the time grid -> resident in VMEM and
        # written back to HBM only once; store it only on the final chunk.
        @pl.when(last_chunk)
        def _store():
            out_ref[...] = h_ref[...].astype(out_ref.dtype)


def _run_rnn_layer(x_tm, wih_t, whh_t, bias, *, seq_len, t_blk, n_batch_blk,
                   last_only, out_dtype, vmem_limit):
    """x_tm: (T_pad, Bp, Ip) time-major, padded. Returns (T_pad, Bp, Hp) or (Bp, Hp)."""
    t_pad, bp, ip = x_tm.shape
    hp = whh_t.shape[1]
    n_chunks = t_pad // t_blk
    b_blk = bp // n_batch_blk

    kernel = functools.partial(
        _rnn_layer_kernel, t_blk=t_blk, seq_len=seq_len, last_only=last_only,
        needs_mask=(last_only and t_pad != seq_len),
        unroll=min(t_blk, 8))

    if last_only:
        out_shape = jax.ShapeDtypeStruct((bp, hp), out_dtype)
        out_spec = pl.BlockSpec((b_blk, hp), lambda b, t: (b, 0))
    else:
        out_shape = jax.ShapeDtypeStruct((t_pad, bp, hp), out_dtype)
        out_spec = pl.BlockSpec((t_blk, b_blk, hp), lambda b, t: (t, b, 0))

    return pl.pallas_call(
        kernel,
        out_shape=out_shape,
        grid_spec=pltpu.PrefetchScalarGridSpec(
            num_scalar_prefetch=0,
            grid=(n_batch_blk, n_chunks),
            in_specs=[
                pl.BlockSpec((t_blk, b_blk, ip), lambda b, t: (t, b, 0)),  # x chunk
                pl.BlockSpec((ip, hp), lambda b, t: (0, 0)),               # Wih (resident)
                pl.BlockSpec((hp, hp), lambda b, t: (0, 0)),               # Whh (resident)
                pl.BlockSpec((1, hp), lambda b, t: (0, 0)),                # bias
            ],
            out_specs=out_spec,
            scratch_shapes=[
                pltpu.VMEM((b_blk, hp), jnp.float32),          # hidden-state carry
                pltpu.VMEM((t_blk, b_blk, hp), jnp.float32),   # input-projection chunk
            ],
        ),
        compiler_params=pltpu.CompilerParams(
            # Batch blocks are independent (sharded across TensorCores on v7x);
            # the time recurrence is strictly sequential.
            dimension_semantics=("parallel", "arbitrary"),
            vmem_limit_bytes=vmem_limit,
        ),
    )(x_tm, wih_t, whh_t, bias)


class RNNLayerPallas:
    """JAX/Pallas equivalent of the PyTorch RNNLayer module (tanh nn.RNN)."""

    def __init__(self, input_size, hidden_size, num_layers, batch_first,
                 bidirectional=False, *, key, compute_dtype=jnp.bfloat16,
                 max_time_block=_T_BLK_CAP):
        assert batch_first, "module is used with batch_first=True semantics"
        assert not bidirectional, "bidirectional not used by RNNLayer default"
        # TODO(synk): bidirectional=True nn.RNN path not implemented (module default is False).
        self.input_size = input_size
        self.hidden_size = hidden_size
        self.num_layers = num_layers
        self.compute_dtype = compute_dtype
        self._h_pad = _round_up(hidden_size, _LANE)
        self._in_pad = _round_up(input_size, _LANE)
        self._vmem_budget = _vmem_budget_bytes()
        self._max_time_block = int(max_time_block)
        self._w_bytes = int(jnp.dtype(compute_dtype).itemsize)

        # PyTorch nn.RNN init: U(-1/sqrt(H), 1/sqrt(H)) for every parameter.
        bound = 1.0 / (hidden_size ** 0.5)
        self.params = []          # raw f32 params (reference semantics)
        self.padded_params = []   # lane/sublane-padded compute-dtype params (kernel)
        for layer in range(num_layers):
            in_sz = input_size if layer == 0 else hidden_size
            in_pad = self._in_pad if layer == 0 else self._h_pad
            key, k1, k2, k3, k4 = jax.random.split(key, 5)
            w_ih = jax.random.uniform(k1, (hidden_size, in_sz), jnp.float32, -bound, bound)
            w_hh = jax.random.uniform(k2, (hidden_size, hidden_size), jnp.float32, -bound, bound)
            b_ih = jax.random.uniform(k3, (hidden_size,), jnp.float32, -bound, bound)
            b_hh = jax.random.uniform(k4, (hidden_size,), jnp.float32, -bound, bound)
            self.params.append((w_ih, w_hh, b_ih, b_hh))

            wih_t = jnp.zeros((in_pad, self._h_pad), compute_dtype)
            wih_t = wih_t.at[:in_sz, :hidden_size].set(w_ih.T.astype(compute_dtype))
            whh_t = jnp.zeros((self._h_pad, self._h_pad), compute_dtype)
            whh_t = whh_t.at[:hidden_size, :hidden_size].set(w_hh.T.astype(compute_dtype))
            bias = jnp.zeros((1, self._h_pad), jnp.float32)
            bias = bias.at[0, :hidden_size].set(b_ih + b_hh)
            self.padded_params.append((wih_t, whh_t, bias))

    @functools.partial(jax.jit, static_argnums=(0, 2))
    def __call__(self, embedding, last_timestep=True):
        # embedding: (B, T, input_size), batch_first like the PyTorch module.
        B, T, _ = embedding.shape
        # Split batch across >1 "parallel" grid blocks only when it is large enough to
        # keep per-block MXU occupancy of the recurrence matmul (>=128 rows per block).
        if B >= 256:
            n_batch_blk = 2
            bp = _round_up(B, 2 * _SUBLANE)
        else:
            n_batch_blk = 1
            bp = _round_up(B, _SUBLANE)
        b_blk = bp // n_batch_blk
        t_blk = _choose_t_blk(T, b_blk, max(self._in_pad, self._h_pad), self._h_pad,
                              self._vmem_budget, self._max_time_block, self._w_bytes)
        t_pad = _round_up(T, t_blk)

        # Time-major + pad to (T_pad, Bp, Ip); zero padding is neutral for the matmuls.
        x = jnp.transpose(embedding, (1, 0, 2)).astype(self.compute_dtype)
        x = jnp.pad(x, ((0, t_pad - T), (0, bp - B),
                        (0, self._in_pad - self.input_size)))

        for li, (wih_t, whh_t, bias) in enumerate(self.padded_params):
            is_last = li == self.num_layers - 1
            x = _run_rnn_layer(
                x, wih_t, whh_t, bias,
                seq_len=T, t_blk=t_blk, n_batch_blk=n_batch_blk,
                last_only=last_timestep and is_last,
                # bf16 inter-layer handoff halves HBM traffic; final output in f32.
                out_dtype=jnp.float32 if is_last else self.compute_dtype,
                vmem_limit=self._vmem_budget)

        H = self.hidden_size
        if last_timestep:
            return x[:B, :H]                         # (B, H)
        out = jnp.transpose(x, (1, 0, 2))            # (Bp, T_pad, Hp), batch_first
        return out[:B, :T, :H]


def _reference_rnn(embedding, params):
    """Pure-JAX f32 reference of nn.RNN (tanh) for a correctness check."""
    x = embedding.astype(jnp.float32)  # (B, T, I)
    for (w_ih, w_hh, b_ih, b_hh) in params:
        B, T, _ = x.shape
        H = w_ih.shape[0]
        h = jnp.zeros((B, H), jnp.float32)
        outs = []
        for t in range(T):
            h = jnp.tanh(x[:, t, :] @ w_ih.T + h @ w_hh.T + b_ih + b_hh)
            outs.append(h)
        x = jnp.stack(outs, axis=1)  # (B, T, H)
    return x


if __name__ == "__main__":
    key = jax.random.PRNGKey(0)

    def run_case(key, batch, seq, input_size, hidden_size, num_layers, max_time_block):
        key, k_x, k_p = jax.random.split(key, 3)
        embedding = jax.random.normal(k_x, (batch, seq, input_size), jnp.float32)
        model = RNNLayerPallas(input_size, hidden_size, num_layers,
                               batch_first=True, key=k_p,
                               max_time_block=max_time_block)
        out_last = model(embedding, True)          # (B, H)
        out_full = model(embedding, False)         # (B, T, H)
        jax.block_until_ready(out_last)
        jax.block_until_ready(out_full)

        # Sanity check against the pure-JAX f32 reference (bf16 MXU -> loose tol).
        ref_full = _reference_rnn(embedding, model.params)
        assert out_last.shape == (batch, hidden_size)
        assert out_full.shape == (batch, seq, hidden_size)
        err_full = float(jnp.max(jnp.abs(out_full - ref_full)))
        err_last = float(jnp.max(jnp.abs(out_last - ref_full[:, -1, :])))
        assert err_full < 5e-2, err_full
        assert err_last < 5e-2, err_last
        return key

    # Small shapes consistent with the module (single time chunk).
    key = run_case(key, 2, 8, 16, 32, 2, _T_BLK_CAP)
    # Multi-chunk path with time padding (exercises hidden-state carry across chunks
    # and the last-chunk-only padded-timestep mask).
    key = run_case(key, 3, 11, 16, 32, 2, 4)

    print("KERNEL_OK")
</pallas_src>

<mosaic_0001>
module attributes {stable_mosaic.version = 11 : i64} {
  func.func @_rnn_layer_kernel(%arg0: i32, %arg1: i32, %arg2: memref<8x16x128xbf16, #tpu.memory_space<vmem>>, %arg3: memref<128x128xbf16, #tpu.memory_space<vmem>>, %arg4: memref<128x128xbf16, #tpu.memory_space<vmem>>, %arg5: memref<1x128xf32, #tpu.memory_space<vmem>>, %arg6: memref<16x128xf32, #tpu.memory_space<vmem>>, %arg7: memref<16x128xf32, #tpu.memory_space<vmem>>, %arg8: memref<8x16x128xf32, #tpu.memory_space<vmem>>) attributes {dimension_semantics = [#tpu.dimension_semantics<parallel>, #tpu.dimension_semantics<arbitrary>], iteration_bounds = array<i64: 1, 1>, scalar_prefetch = 0 : i64, scratch_operands = 2 : i64, tpu.core_type = #tpu.core_type<tc>, window_params = [{transform_indices = @transform_0, window_bounds = array<i64: 8, 16, 128>}, {pipeline_mode = #tpu.pipeline_mode<synchronous>, transform_indices = @transform_1, window_bounds = array<i64: 128, 128>}, {pipeline_mode = #tpu.pipeline_mode<synchronous>, transform_indices = @transform_2, window_bounds = array<i64: 128, 128>}, {pipeline_mode = #tpu.pipeline_mode<synchronous>, transform_indices = @transform_3, window_bounds = array<i64: 1, 128>}, {transform_indices = @transform_4, window_bounds = array<i64: 16, 128>}]} {
    %c0_i32 = arith.constant 0 : i32
    %0 = arith.cmpi eq, %arg1, %c0_i32 : i32
    %c0_i32_0 = arith.constant 0 : i32
    %1 = arith.cmpi eq, %arg1, %c0_i32_0 : i32
    %2 = arith.extui %1 : i1 to i32
    %c0_i32_1 = arith.constant 0 : i32
    %3 = arith.cmpi ne, %2, %c0_i32_1 : i32
    scf.if %3 {
      %cst_43 = arith.constant 0.000000e+00 : f32
      %74 = vector.broadcast %cst_43 : f32 to vector<16x128xf32>
      %c0_44 = arith.constant 0 : index
      %c0_45 = arith.constant 0 : index
      %75 = vector.load %arg7[%c0_44, %c0_45] : memref<16x128xf32, #tpu.memory_space<vmem>>, vector<16x128xf32>
      tpu.vector_store %arg7[%c0_44, %c0_45], %74 {strides = array<i32>} : memref<16x128xf32, #tpu.memory_space<vmem>>, vector<16x128xf32>,
    } else {
    }
    %c0 = arith.constant 0 : index
    %c0_2 = arith.constant 0 : index
    %c0_3 = arith.constant 0 : index
    %4 = vector.load %arg2[%c0, %c0_2, %c0_3] : memref<8x16x128xbf16, #tpu.memory_space<vmem>>, vector<8x16x128xbf16>
    %5 = vector.shape_cast %4 : vector<8x16x128xbf16> to vector<128x128xbf16>
    %c0_4 = arith.constant 0 : index
    %c0_5 = arith.constant 0 : index
    %6 = vector.load %arg3[%c0_4, %c0_5] : memref<128x128xbf16, #tpu.memory_space<vmem>>, vector<128x128xbf16>
    %cst = arith.constant dense<0.000000e+00> : vector<128x128xf32>
    %7 = tpu.matmul %5, %6, %cst {dimension_numbers = #tpu.dot_dimension_numbers<[1], [0], [0], [1], [0, 0, 1, 1], [], []>} : vector<128x128xbf16>, vector<128x128xbf16>, vector<128x128xf32> -> vector<128x128xf32>
    %c0_6 = arith.constant 0 : index
    %c0_7 = arith.constant 0 : index
    %8 = vector.load %arg5[%c0_6, %c0_7] : memref<1x128xf32, #tpu.memory_space<vmem>>, vector<1x128xf32>
    %9 = vector.broadcast %8 : vector<1x128xf32> to vector<128x128xf32>
    %10 = arith.addf %7, %9 : vector<128x128xf32>
    %11 = vector.shape_cast %10 : vector<128x128xf32> to vector<8x16x128xf32>
    %c0_8 = arith.constant 0 : index
    %c0_9 = arith.constant 0 : index
    %c0_10 = arith.constant 0 : index
    %12 = vector.load %arg8[%c0_8, %c0_9, %c0_10] : memref<8x16x128xf32, #tpu.memory_space<vmem>>, vector<8x16x128xf32>
    tpu.vector_store %arg8[%c0_8, %c0_9, %c0_10], %11 {strides = array<i32>} : memref<8x16x128xf32, #tpu.memory_space<vmem>>, vector<8x16x128xf32>,
    %c0_11 = arith.constant 0 : index
    %c0_12 = arith.constant 0 : index
    %13 = vector.load %arg4[%c0_11, %c0_12] : memref<128x128xbf16, #tpu.memory_space<vmem>>, vector<128x128xbf16>
    %c0_13 = arith.constant 0 : index
    %c0_14 = arith.constant 0 : index
    %14 = vector.load %arg7[%c0_13, %c0_14] : memref<16x128xf32, #tpu.memory_space<vmem>>, vector<16x128xf32>
    %c0_i32_15 = arith.constant 0 : i32
    %15 = arith.index_cast %c0_i32_15 : i32 to index
    %c0_16 = arith.constant 0 : index
    %c0_17 = arith.constant 0 : index
    %16 = vector.load %arg8[%15, %c0_16, %c0_17] : memref<8x16x128xf32, #tpu.memory_space<vmem>>, vector<1x16x128xf32>
    %17 = vector.shape_cast %16 : vector<1x16x128xf32> to vector<16x128xf32>
    %18 = arith.truncf %14 : vector<16x128xf32> to vector<16x128xbf16>
    %cst_18 = arith.constant dense<0.000000e+00> : vector<16x128xf32>
    %19 = tpu.matmul %18, %13, %cst_18 {dimension_numbers = #tpu.dot_dimension_numbers<[1], [0], [0], [1], [0, 0, 1, 1], [], []>} : vector<16x128xbf16>, vector<128x128xbf16>, vector<16x128xf32> -> vector<16x128xf32>
    %20 = arith.addf %17, %19 : vector<16x128xf32>
    %21 = math.tanh %20 : vector<16x128xf32>
    %c1_i32 = arith.constant 1 : i32
    %22 = arith.index_cast %c1_i32 : i32 to index
    %c0_19 = arith.constant 0 : index
    %c0_20 = arith.constant 0 : index
    %23 = vector.load %arg8[%22, %c0_19, %c0_20] : memref<8x16x128xf32, #tpu.memory_space<vmem>>, vector<1x16x128xf32>
    %24 = vector.shape_cast %23 : vector<1x16x128xf32> to vector<16x128xf32>
    %25 = arith.truncf %21 : vector<16x128xf32> to vector<16x128xbf16>
    %cst_21 = arith.constant dense<0.000000e+00> : vector<16x128xf32>
    %26 = tpu.matmul %25, %13, %cst_21 {dimension_numbers = #tpu.dot_dimension_numbers<[1], [0], [0], [1], [0, 0, 1, 1], [], []>} : vector<16x128xbf16>, vector<128x128xbf16>, vector<16x128xf32> -> vector<16x128xf32>
    %27 = arith.addf %24, %26 : vector<16x128xf32>
    %28 = math.tanh %27 : vector<16x128xf32>
    %c2_i32 = arith.constant 2 : i32
    %29 = arith.index_cast %c2_i32 : i32 to index
    %c0_22 = arith.constant 0 : index
    %c0_23 = arith.constant 0 : index
    %30 = vector.load %arg8[%29, %c0_22, %c0_23] : memref<8x16x128xf32, #tpu.memory_space<vmem>>, vector<1x16x128xf32>
    %31 = vector.shape_cast %30 : vector<1x16x128xf32> to vector<16x128xf32>
    %32 = arith.truncf %28 : vector<16x128xf32> to vector<16x128xbf16>
    %cst_24 = arith.constant dense<0.000000e+00> : vector<16x128xf32>
    %33 = tpu.matmul %32, %13, %cst_24 {dimension_numbers = #tpu.dot_dimension_numbers<[1], [0], [0], [1], [0, 0, 1, 1], [], []>} : vector<16x128xbf16>, vector<128x128xbf16>, vector<16x128xf32> -> vector<16x128xf32>
    %34 = arith.addf %31, %33 : vector<16x128xf32>
    %35 = math.tanh %34 : vector<16x128xf32>
    %c3_i32 = arith.constant 3 : i32
    %36 = arith.index_cast %c3_i32 : i32 to index
    %c0_25 = arith.constant 0 : index
    %c0_26 = arith.constant 0 : index
    %37 = vector.load %arg8[%36, %c0_25, %c0_26] : memref<8x16x128xf32, #tpu.memory_space<vmem>>, vector<1x16x128xf32>
    %38 = vector.shape_cast %37 : vector<1x16x128xf32> to vector<16x128xf32>
    %39 = arith.truncf %35 : vector<16x128xf32> to vector<16x128xbf16>
    %cst_27 = arith.constant dense<0.000000e+00> : vector<16x128xf32>
    %40 = tpu.matmul %39, %13, %cst_27 {dimension_numbers = #tpu.dot_dimension_numbers<[1], [0], [0], [1], [0, 0, 1, 1], [], []>} : vector<16x128xbf16>, vector<128x128xbf16>, vector<16x128xf32> -> vector<16x128xf32>
    %41 = arith.addf %38, %40 : vector<16x128xf32>
    %42 = math.tanh %41 : vector<16x128xf32>
    %c4_i32 = arith.constant 4 : i32
    %43 = arith.index_cast %c4_i32 : i32 to index
    %c0_28 = arith.constant 0 : index
    %c0_29 = arith.constant 0 : index
    %44 = vector.load %arg8[%43, %c0_28, %c0_29] : memref<8x16x128xf32, #tpu.memory_space<vmem>>, vector<1x16x128xf32>
    %45 = vector.shape_cast %44 : vector<1x16x128xf32> to vector<16x128xf32>
    %46 = arith.truncf %42 : vector<16x128xf32> to vector<16x128xbf16>
    %cst_30 = arith.constant dense<0.000000e+00> : vector<16x128xf32>
    %47 = tpu.matmul %46, %13, %cst_30 {dimension_numbers = #tpu.dot_dimension_numbers<[1], [0], [0], [1], [0, 0, 1, 1], [], []>} : vector<16x128xbf16>, vector<128x128xbf16>, vector<16x128xf32> -> vector<16x128xf32>
    %48 = arith.addf %45, %47 : vector<16x128xf32>
    %49 = math.tanh %48 : vector<16x128xf32>
    %c5_i32 = arith.constant 5 : i32
    %50 = arith.index_cast %c5_i32 : i32 to index
    %c0_31 = arith.constant 0 : index
    %c0_32 = arith.constant 0 : index
    %51 = vector.load %arg8[%50, %c0_31, %c0_32] : memref<8x16x128xf32, #tpu.memory_space<vmem>>, vector<1x16x128xf32>
    %52 = vector.shape_cast %51 : vector<1x16x128xf32> to vector<16x128xf32>
    %53 = arith.truncf %49 : vector<16x128xf32> to vector<16x128xbf16>
    %cst_33 = arith.constant dense<0.000000e+00> : vector<16x128xf32>
    %54 = tpu.matmul %53, %13, %cst_33 {dimension_numbers = #tpu.dot_dimension_numbers<[1], [0], [0], [1], [0, 0, 1, 1], [], []>} : vector<16x128xbf16>, vector<128x128xbf16>, vector<16x128xf32> -> vector<16x128xf32>
    %55 = arith.addf %52, %54 : vector<16x128xf32>
    %56 = math.tanh %55 : vector<16x128xf32>
    %c6_i32 = arith.constant 6 : i32
    %57 = arith.index_cast %c6_i32 : i32 to index
    %c0_34 = arith.constant 0 : index
    %c0_35 = arith.constant 0 : index
    %58 = vector.load %arg8[%57, %c0_34, %c0_35] : memref<8x16x128xf32, #tpu.memory_space<vmem>>, vector<1x16x128xf32>
    %59 = vector.shape_cast %58 : vector<1x16x128xf32> to vector<16x128xf32>
    %60 = arith.truncf %56 : vector<16x128xf32> to vector<16x128xbf16>
    %cst_36 = arith.constant dense<0.000000e+00> : vector<16x128xf32>
    %61 = tpu.matmul %60, %13, %cst_36 {dimension_numbers = #tpu.dot_dimension_numbers<[1], [0], [0], [1], [0, 0, 1, 1], [], []>} : vector<16x128xbf16>, vector<128x128xbf16>, vector<16x128xf32> -> vector<16x128xf32>
    %62 = arith.addf %59, %61 : vector<16x128xf32>
    %63 = math.tanh %62 : vector<16x128xf32>
    %c7_i32 = arith.constant 7 : i32
    %64 = arith.index_cast %c7_i32 : i32 to index
    %c0_37 = arith.constant 0 : index
    %c0_38 = arith.constant 0 : index
    %65 = vector.load %arg8[%64, %c0_37, %c0_38] : memref<8x16x128xf32, #tpu.memory_space<vmem>>, vector<1x16x128xf32>
    %66 = vector.shape_cast %65 : vector<1x16x128xf32> to vector<16x128xf32>
    %67 = arith.truncf %63 : vector<16x128xf32> to vector<16x128xbf16>
    %cst_39 = arith.constant dense<0.000000e+00> : vector<16x128xf32>
    %68 = tpu.matmul %67, %13, %cst_39 {dimension_numbers = #tpu.dot_dimension_numbers<[1], [0], [0], [1], [0, 0, 1, 1], [], []>} : vector<16x128xbf16>, vector<128x128xbf16>, vector<16x128xf32> -> vector<16x128xf32>
    %69 = arith.addf %66, %68 : vector<16x128xf32>
    %70 = math.tanh %69 : vector<16x128xf32>
    %c8_i32 = arith.constant 8 : i32
    %c0_40 = arith.constant 0 : index
    %c0_41 = arith.constant 0 : index
    %71 = vector.load %arg7[%c0_40, %c0_41] : memref<16x128xf32, #tpu.memory_space<vmem>>, vector<16x128xf32>
    tpu.vector_store %arg7[%c0_40, %c0_41], %70 {strides = array<i32>} : memref<16x128xf32, #tpu.memory_space<vmem>>, vector<16x128xf32>,
    %72 = arith.extui %0 : i1 to i32
    %c0_i32_42 = arith.constant 0 : i32
    %73 = arith.cmpi ne, %72, %c0_i32_42 : i32
    scf.if %73 {
      %c0_43 = arith.constant 0 : index
      %c0_44 = arith.constant 0 : index
      %74 = vector.load %arg7[%c0_43, %c0_44] : memref<16x128xf32, #tpu.memory_space<vmem>>, vector<16x128xf32>
      %c0_45 = arith.constant 0 : index
      %c0_46 = arith.constant 0 : index
      %75 = vector.load %arg6[%c0_45, %c0_46] : memref<16x128xf32, #tpu.memory_space<vmem>>, vector<16x128xf32>
      tpu.vector_store %arg6[%c0_45, %c0_46], %74 {strides = array<i32>} : memref<16x128xf32, #tpu.memory_space<vmem>>, vector<16x128xf32>,
    } else {
    }
    return
  }
  func.func @transform_0(%arg0: i32, %arg1: i32) -> (i32, i32, i32) {
    %c0_i32 = arith.constant 0 : i32
    %c0_i32_0 = arith.constant 0 : i32
    return %arg1, %arg0, %c0_i32 : i32, i32, i32
  }
  func.func @transform_1(%arg0: i32, %arg1: i32) -> (i32, i32) {
    %c0_i32 = arith.constant 0 : i32
    %c0_i32_0 = arith.constant 0 : i32
    %c0_i32_1 = arith.constant 0 : i32
    return %c0_i32, %c0_i32_0 : i32, i32
  }
  func.func @transform_2(%arg0: i32, %arg1: i32) -> (i32, i32) {
    %c0_i32 = arith.constant 0 : i32
    %c0_i32_0 = arith.constant 0 : i32
    %c0_i32_1 = arith.constant 0 : i32
    return %c0_i32, %c0_i32_0 : i32, i32
  }
  func.func @transform_3(%arg0: i32, %arg1: i32) -> (i32, i32) {
    %c0_i32 = arith.constant 0 : i32
    %c0_i32_0 = arith.constant 0 : i32
    %c0_i32_1 = arith.constant 0 : i32
    return %c0_i32, %c0_i32_0 : i32, i32
  }
  func.func @transform_4(%arg0: i32, %arg1: i32) -> (i32, i32) {
    %c0_i32 = arith.constant 0 : i32
    %c0_i32_0 = arith.constant 0 : i32
    return %arg0, %c0_i32 : i32, i32
  }
}

module attributes {stable_mosaic.version = 11 : i64} {
  func.func @_rnn_layer_kernel(%arg0: i32, %arg1: i32, %arg2: memref<8x16x128xbf16, #tpu.memory_space<vmem>>, %arg3: memref<128x128xbf16, #tpu.memory_space<vmem>>, %arg4: memref<128x128xbf16, #tpu.memory_space<vmem>>, %arg5: memref<1x128xf32, #tpu.memory_space<vmem>>, %arg6: memref<8x16x128xbf16, #tpu.memory_space<vmem>>, %arg7: memref<16x128xf32, #tpu.memory_space<vmem>>, %arg8: memref<8x16x128xf32, #tpu.memory_space<vmem>>) attributes {dimension_semantics = [#tpu.dimension_semantics<parallel>, #tpu.dimension_semantics<arbitrary>], iteration_bounds = array<i64: 1, 1>, scalar_prefetch = 0 : i64, scratch_operands = 2 : i64, tpu.core_type = #tpu.core_type<tc>, window_params = [{transform_indices = @transform_0, window_bounds = array<i64: 8, 16, 128>}, {pipeline_mode = #tpu.pipeline_mode<synchronous>, transform_indices = @transform_1, window_bounds = array<i64: 128, 128>}, {pipeline_mode = #tpu.pipeline_mode<synchronous>, transform_indices = @transform_2, window_bounds = array<i64: 128, 128>}, {pipeline_mode = #tpu.pipeline_mode<synchronous>, transform_indices = @transform_3, window_bounds = array<i64: 1, 128>}, {transform_indices = @transform_4, window_bounds = array<i64: 8, 16, 128>}]} {
    %c0_i32 = arith.constant 0 : i32
    %0 = arith.cmpi eq, %arg1, %c0_i32 : i32
    %1 = arith.extui %0 : i1 to i32
    %c0_i32_0 = arith.constant 0 : i32
    %2 = arith.cmpi ne, %1, %c0_i32_0 : i32
    scf.if %2 {
      %cst_57 = arith.constant 0.000000e+00 : f32
      %111 = vector.broadcast %cst_57 : f32 to vector<16x128xf32>
      %c0_58 = arith.constant 0 : index
      %c0_59 = arith.constant 0 : index
      %112 = vector.load %arg7[%c0_58, %c0_59] : memref<16x128xf32, #tpu.memory_space<vmem>>, vector<16x128xf32>
      tpu.vector_store %arg7[%c0_58, %c0_59], %111 {strides = array<i32>} : memref<16x128xf32, #tpu.memory_space<vmem>>, vector<16x128xf32>,
    } else {
    }
    %c0 = arith.constant 0 : index
    %c0_1 = arith.constant 0 : index
    %c0_2 = arith.constant 0 : index
    %3 = vector.load %arg2[%c0, %c0_1, %c0_2] : memref<8x16x128xbf16, #tpu.memory_space<vmem>>, vector<8x16x128xbf16>
    %4 = vector.shape_cast %3 : vector<8x16x128xbf16> to vector<128x128xbf16>
    %c0_3 = arith.constant 0 : index
    %c0_4 = arith.constant 0 : index
    %5 = vector.load %arg3[%c0_3, %c0_4] : memref<128x128xbf16, #tpu.memory_space<vmem>>, vector<128x128xbf16>
    %cst = arith.constant dense<0.000000e+00> : vector<128x128xf32>
    %6 = tpu.matmul %4, %5, %cst {dimension_numbers = #tpu.dot_dimension_numbers<[1], [0], [0], [1], [0, 0, 1, 1], [], []>} : vector<128x128xbf16>, vector<128x128xbf16>, vector<128x128xf32> -> vector<128x128xf32>
    %c0_5 = arith.constant 0 : index
    %c0_6 = arith.constant 0 : index
    %7 = vector.load %arg5[%c0_5, %c0_6] : memref<1x128xf32, #tpu.memory_space<vmem>>, vector<1x128xf32>
    %8 = vector.broadcast %7 : vector<1x128xf32> to vector<128x128xf32>
    %9 = arith.addf %6, %8 : vector<128x128xf32>
    %10 = vector.shape_cast %9 : vector<128x128xf32> to vector<8x16x128xf32>
    %c0_7 = arith.constant 0 : index
    %c0_8 = arith.constant 0 : index
    %c0_9 = arith.constant 0 : index
    %11 = vector.load %arg8[%c0_7, %c0_8, %c0_9] : memref<8x16x128xf32, #tpu.memory_space<vmem>>, vector<8x16x128xf32>
    tpu.vector_store %arg8[%c0_7, %c0_8, %c0_9], %10 {strides = array<i32>} : memref<8x16x128xf32, #tpu.memory_space<vmem>>, vector<8x16x128xf32>,
    %c0_10 = arith.constant 0 : index
    %c0_11 = arith.constant 0 : index
    %12 = vector.load %arg4[%c0_10, %c0_11] : memref<128x128xbf16, #tpu.memory_space<vmem>>, vector<128x128xbf16>
    %c0_12 = arith.constant 0 : index
    %c0_13 = arith.constant 0 : index
    %13 = vector.load %arg7[%c0_12, %c0_13] : memref<16x128xf32, #tpu.memory_space<vmem>>, vector<16x128xf32>
    %c0_i32_14 = arith.constant 0 : i32
    %14 = arith.index_cast %c0_i32_14 : i32 to index
    %c0_15 = arith.constant 0 : index
    %c0_16 = arith.constant 0 : index
    %15 = vector.load %arg8[%14, %c0_15, %c0_16] : memref<8x16x128xf32, #tpu.memory_space<vmem>>, vector<1x16x128xf32>
    %16 = vector.shape_cast %15 : vector<1x16x128xf32> to vector<16x128xf32>
    %17 = arith.truncf %13 : vector<16x128xf32> to vector<16x128xbf16>
    %cst_17 = arith.constant dense<0.000000e+00> : vector<16x128xf32>
    %18 = tpu.matmul %17, %12, %cst_17 {dimension_numbers = #tpu.dot_dimension_numbers<[1], [0], [0], [1], [0, 0, 1, 1], [], []>} : vector<16x128xbf16>, vector<128x128xbf16>, vector<16x128xf32> -> vector<16x128xf32>
    %19 = arith.addf %16, %18 : vector<16x128xf32>
    %20 = math.tanh %19 : vector<16x128xf32>
    %21 = arith.truncf %20 : vector<16x128xf32> to vector<16x128xbf16>
    %22 = arith.index_cast %c0_i32_14 : i32 to index
    %c0_18 = arith.constant 0 : index
    %c0_19 = arith.constant 0 : index
    %23 = vector.load %arg6[%22, %c0_18, %c0_19] : memref<8x16x128xbf16, #tpu.memory_space<vmem>>, vector<1x16x128xbf16>
    %24 = vector.shape_cast %23 : vector<1x16x128xbf16> to vector<16x128xbf16>
    %25 = vector.shape_cast %21 : vector<16x128xbf16> to vector<1x16x128xbf16>
    tpu.vector_store %arg6[%22, %c0_18, %c0_19], %25 {strides = array<i32>} : memref<8x16x128xbf16, #tpu.memory_space<vmem>>, vector<1x16x128xbf16>,
    %c1_i32 = arith.constant 1 : i32
    %26 = arith.index_cast %c1_i32 : i32 to index
    %c0_20 = arith.constant 0 : index
    %c0_21 = arith.constant 0 : index
    %27 = vector.load %arg8[%26, %c0_20, %c0_21] : memref<8x16x128xf32, #tpu.memory_space<vmem>>, vector<1x16x128xf32>
    %28 = vector.shape_cast %27 : vector<1x16x128xf32> to vector<16x128xf32>
    %29 = arith.truncf %20 : vector<16x128xf32> to vector<16x128xbf16>
    %cst_22 = arith.constant dense<0.000000e+00> : vector<16x128xf32>
    %30 = tpu.matmul %29, %12, %cst_22 {dimension_numbers = #tpu.dot_dimension_numbers<[1], [0], [0], [1], [0, 0, 1, 1], [], []>} : vector<16x128xbf16>, vector<128x128xbf16>, vector<16x128xf32> -> vector<16x128xf32>
    %31 = arith.addf %28, %30 : vector<16x128xf32>
    %32 = math.tanh %31 : vector<16x128xf32>
    %33 = arith.truncf %32 : vector<16x128xf32> to vector<16x128xbf16>
    %34 = arith.index_cast %c1_i32 : i32 to index
    %c0_23 = arith.constant 0 : index
    %c0_24 = arith.constant 0 : index
    %35 = vector.load %arg6[%34, %c0_23, %c0_24] : memref<8x16x128xbf16, #tpu.memory_space<vmem>>, vector<1x16x128xbf16>
    %36 = vector.shape_cast %35 : vector<1x16x128xbf16> to vector<16x128xbf16>
    %37 = vector.shape_cast %33 : vector<16x128xbf16> to vector<1x16x128xbf16>
    tpu.vector_store %arg6[%34, %c0_23, %c0_24], %37 {strides = array<i32>} : memref<8x16x128xbf16, #tpu.memory_space<vmem>>, vector<1x16x128xbf16>,
    %c2_i32 = arith.constant 2 : i32
    %38 = arith.index_cast %c2_i32 : i32 to index
    %c0_25 = arith.constant 0 : index
    %c0_26 = arith.constant 0 : index
    %39 = vector.load %arg8[%38, %c0_25, %c0_26] : memref<8x16x128xf32, #tpu.memory_space<vmem>>, vector<1x16x128xf32>
    %40 = vector.shape_cast %39 : vector<1x16x128xf32> to vector<16x128xf32>
    %41 = arith.truncf %32 : vector<16x128xf32> to vector<16x128xbf16>
    %cst_27 = arith.constant dense<0.000000e+00> : vector<16x128xf32>
    %42 = tpu.matmul %41, %12, %cst_27 {dimension_numbers = #tpu.dot_dimension_numbers<[1], [0], [0], [1], [0, 0, 1, 1], [], []>} : vector<16x128xbf16>, vector<128x128xbf16>, vector<16x128xf32> -> vector<16x128xf32>
    %43 = arith.addf %40, %42 : vector<16x128xf32>
    %44 = math.tanh %43 : vector<16x128xf32>
    %45 = arith.truncf %44 : vector<16x128xf32> to vector<16x128xbf16>
    %46 = arith.index_cast %c2_i32 : i32 to index
    %c0_28 = arith.constant 0 : index
    %c0_29 = arith.constant 0 : index
    %47 = vector.load %arg6[%46, %c0_28, %c0_29] : memref<8x16x128xbf16, #tpu.memory_space<vmem>>, vector<1x16x128xbf16>
    %48 = vector.shape_cast %47 : vector<1x16x128xbf16> to vector<16x128xbf16>
    %49 = vector.shape_cast %45 : vector<16x128xbf16> to vector<1x16x128xbf16>
    tpu.vector_store %arg6[%46, %c0_28, %c0_29], %49 {strides = array<i32>} : memref<8x16x128xbf16, #tpu.memory_space<vmem>>, vector<1x16x128xbf16>,
    %c3_i32 = arith.constant 3 : i32
    %50 = arith.index_cast %c3_i32 : i32 to index
    %c0_30 = arith.constant 0 : index
    %c0_31 = arith.constant 0 : index
    %51 = vector.load %arg8[%50, %c0_30, %c0_31] : memref<8x16x128xf32, #tpu.memory_space<vmem>>, vector<1x16x128xf32>
    %52 = vector.shape_cast %51 : vector<1x16x128xf32> to vector<16x128xf32>
    %53 = arith.truncf %44 : vector<16x128xf32> to vector<16x128xbf16>
    %cst_32 = arith.constant dense<0.000000e+00> : vector<16x128xf32>
    %54 = tpu.matmul %53, %12, %cst_32 {dimension_numbers = #tpu.dot_dimension_numbers<[1], [0], [0], [1], [0, 0, 1, 1], [], []>} : vector<16x128xbf16>, vector<128x128xbf16>, vector<16x128xf32> -> vector<16x128xf32>
    %55 = arith.addf %52, %54 : vector<16x128xf32>
    %56 = math.tanh %55 : vector<16x128xf32>
    %57 = arith.truncf %56 : vector<16x128xf32> to vector<16x128xbf16>
    %58 = arith.index_cast %c3_i32 : i32 to index
    %c0_33 = arith.constant 0 : index
    %c0_34 = arith.constant 0 : index
    %59 = vector.load %arg6[%58, %c0_33, %c0_34] : memref<8x16x128xbf16, #tpu.memory_space<vmem>>, vector<1x16x128xbf16>
    %60 = vector.shape_cast %59 : vector<1x16x128xbf16> to vector<16x128xbf16>
    %61 = vector.shape_cast %57 : vector<16x128xbf16> to vector<1x16x128xbf16>
    tpu.vector_store %arg6[%58, %c0_33, %c0_34], %61 {strides = array<i32>} : memref<8x16x128xbf16, #tpu.memory_space<vmem>>, vector<1x16x128xbf16>,
    %c4_i32 = arith.constant 4 : i32
    %62 = arith.index_cast %c4_i32 : i32 to index
    %c0_35 = arith.constant 0 : index
    %c0_36 = arith.constant 0 : index
    %63 = vector.load %arg8[%62, %c0_35, %c0_36] : memref<8x16x128xf32, #tpu.memory_space<vmem>>, vector<1x16x128xf32>
    %64 = vector.shape_cast %63 : vector<1x16x128xf32> to vector<16x128xf32>
    %65 = arith.truncf %56 : vector<16x128xf32> to vector<16x128xbf16>
    %cst_37 = arith.constant dense<0.000000e+00> : vector<16x128xf32>
    %66 = tpu.matmul %65, %12, %cst_37 {dimension_numbers = #tpu.dot_dimension_numbers<[1], [0], [0], [1], [0, 0, 1, 1], [], []>} : vector<16x128xbf16>, vector<128x128xbf16>, vector<16x128xf32> -> vector<16x128xf32>
    %67 = arith.addf %64, %66 : vector<16x128xf32>
    %68 = math.tanh %67 : vector<16x128xf32>
    %69 = arith.truncf %68 : vector<16x128xf32> to vector<16x128xbf16>
    %70 = arith.index_cast %c4_i32 : i32 to index
    %c0_38 = arith.constant 0 : index
    %c0_39 = arith.constant 0 : index
    %71 = vector.load %arg6[%70, %c0_38, %c0_39] : memref<8x16x128xbf16, #tpu.memory_space<vmem>>, vector<1x16x128xbf16>
    %72 = vector.shape_cast %71 : vector<1x16x128xbf16> to vector<16x128xbf16>
    %73 = vector.shape_cast %69 : vector<16x128xbf16> to vector<1x16x128xbf16>
    tpu.vector_store %arg6[%70, %c0_38, %c0_39], %73 {strides = array<i32>} : memref<8x16x128xbf16, #tpu.memory_space<vmem>>, vector<1x16x128xbf16>,
    %c5_i32 = arith.constant 5 : i32
    %74 = arith.index_cast %c5_i32 : i32 to index
    %c0_40 = arith.constant 0 : index
    %c0_41 = arith.constant 0 : index
    %75 = vector.load %arg8[%74, %c0_40, %c0_41] : memref<8x16x128xf32, #tpu.memory_space<vmem>>, vector<1x16x128xf32>
    %76 = vector.shape_cast %75 : vector<1x16x128xf32> to vector<16x128xf32>
    %77 = arith.truncf %68 : vector<16x128xf32> to vector<16x128xbf16>
    %cst_42 = arith.constant dense<0.000000e+00> : vector<16x128xf32>
    %78 = tpu.matmul %77, %12, %cst_42 {dimension_numbers = #tpu.dot_dimension_numbers<[1], [0], [0], [1], [0, 0, 1, 1], [], []>} : vector<16x128xbf16>, vector<128x128xbf16>, vector<16x128xf32> -> vector<16x128xf32>
    %79 = arith.addf %76, %78 : vector<16x128xf32>
    %80 = math.tanh %79 : vector<16x128xf32>
    %81 = arith.truncf %80 : vector<16x128xf32> to vector<16x128xbf16>
    %82 = arith.index_cast %c5_i32 : i32 to index
    %c0_43 = arith.constant 0 : index
    %c0_44 = arith.constant 0 : index
    %83 = vector.load %arg6[%82, %c0_43, %c0_44] : memref<8x16x128xbf16, #tpu.memory_space<vmem>>, vector<1x16x128xbf16>
    %84 = vector.shape_cast %83 : vector<1x16x128xbf16> to vector<16x128xbf16>
    %85 = vector.shape_cast %81 : vector<16x128xbf16> to vector<1x16x128xbf16>
    tpu.vector_store %arg6[%82, %c0_43, %c0_44], %85 {strides = array<i32>} : memref<8x16x128xbf16, #tpu.memory_space<vmem>>, vector<1x16x128xbf16>,
    %c6_i32 = arith.constant 6 : i32
    %86 = arith.index_cast %c6_i32 : i32 to index
    %c0_45 = arith.constant 0 : index
    %c0_46 = arith.constant 0 : index
    %87 = vector.load %arg8[%86, %c0_45, %c0_46] : memref<8x16x128xf32, #tpu.memory_space<vmem>>, vector<1x16x128xf32>
    %88 = vector.shape_cast %87 : vector<1x16x128xf32> to vector<16x128xf32>
    %89 = arith.truncf %80 : vector<16x128xf32> to vector<16x128xbf16>
    %cst_47 = arith.constant dense<0.000000e+00> : vector<16x128xf32>
    %90 = tpu.matmul %89, %12, %cst_47 {dimension_numbers = #tpu.dot_dimension_numbers<[1], [0], [0], [1], [0, 0, 1, 1], [], []>} : vector<16x128xbf16>, vector<128x128xbf16>, vector<16x128xf32> -> vector<16x128xf32>
    %91 = arith.addf %88, %90 : vector<16x128xf32>
    %92 = math.tanh %91 : vector<16x128xf32>
    %93 = arith.truncf %92 : vector<16x128xf32> to vector<16x128xbf16>
    %94 = arith.index_cast %c6_i32 : i32 to index
    %c0_48 = arith.constant 0 : index
    %c0_49 = arith.constant 0 : index
    %95 = vector.load %arg6[%94, %c0_48, %c0_49] : memref<8x16x128xbf16, #tpu.memory_space<vmem>>, vector<1x16x128xbf16>
    %96 = vector.shape_cast %95 : vector<1x16x128xbf16> to vector<16x128xbf16>
    %97 = vector.shape_cast %93 : vector<16x128xbf16> to vector<1x16x128xbf16>
    tpu.vector_store %arg6[%94, %c0_48, %c0_49], %97 {strides = array<i32>} : memref<8x16x128xbf16, #tpu.memory_space<vmem>>, vector<1x16x128xbf16>,
    %c7_i32 = arith.constant 7 : i32
    %98 = arith.index_cast %c7_i32 : i32 to index
    %c0_50 = arith.constant 0 : index
    %c0_51 = arith.constant 0 : index
    %99 = vector.load %arg8[%98, %c0_50, %c0_51] : memref<8x16x128xf32, #tpu.memory_space<vmem>>, vector<1x16x128xf32>
    %100 = vector.shape_cast %99 : vector<1x16x128xf32> to vector<16x128xf32>
    %101 = arith.truncf %92 : vector<16x128xf32> to vector<16x128xbf16>
    %cst_52 = arith.constant dense<0.000000e+00> : vector<16x128xf32>
    %102 = tpu.matmul %101, %12, %cst_52 {dimension_numbers = #tpu.dot_dimension_numbers<[1], [0], [0], [1], [0, 0, 1, 1], [], []>} : vector<16x128xbf16>, vector<128x128xbf16>, vector<16x128xf32> -> vector<16x128xf32>
    %103 = arith.addf %100, %102 : vector<16x128xf32>
    %104 = math.tanh %103 : vector<16x128xf32>
    %105 = arith.truncf %104 : vector<16x128xf32> to vector<16x128xbf16>
    %106 = arith.index_cast %c7_i32 : i32 to index
    %c0_53 = arith.constant 0 : index
    %c0_54 = arith.constant 0 : index
    %107 = vector.load %arg6[%106, %c0_53, %c0_54] : memref<8x16x128xbf16, #tpu.memory_space<vmem>>, vector<1x16x128xbf16>
    %108 = vector.shape_cast %107 : vector<1x16x128xbf16> to vector<16x128xbf16>
    %109 = vector.shape_cast %105 : vector<16x128xbf16> to vector<1x16x128xbf16>
    tpu.vector_store %arg6[%106, %c0_53, %c0_54], %109 {strides = array<i32>} : memref<8x16x128xbf16, #tpu.memory_space<vmem>>, vector<1x16x128xbf16>,
    %c8_i32 = arith.constant 8 : i32
    %c0_55 = arith.constant 0 : index
    %c0_56 = arith.constant 0 : index
    %110 = vector.load %arg7[%c0_55, %c0_56] : memref<16x128xf32, #tpu.memory_space<vmem>>, vector<16x128xf32>
    tpu.vector_store %arg7[%c0_55, %c0_56], %104 {strides = array<i32>} : memref<16x128xf32, #tpu.memory_space<vmem>>, vector<16x128xf32>,
    return
  }
  func.func @transform_0(%arg0: i32, %arg1: i32) -> (i32, i32, i32) {
    %c0_i32 = arith.constant 0 : i32
    %c0_i32_0 = arith.constant 0 : i32
    return %arg1, %arg0, %c0_i32 : i32, i32, i32
  }
  func.func @transform_1(%arg0: i32, %arg1: i32) -> (i32, i32) {
    %c0_i32 = arith.constant 0 : i32
    %c0_i32_0 = arith.constant 0 : i32
    %c0_i32_1 = arith.constant 0 : i32
    return %c0_i32, %c0_i32_0 : i32, i32
  }
  func.func @transform_2(%arg0: i32, %arg1: i32) -> (i32, i32) {
    %c0_i32 = arith.constant 0 : i32
    %c0_i32_0 = arith.constant 0 : i32
    %c0_i32_1 = arith.constant 0 : i32
    return %c0_i32, %c0_i32_0 : i32, i32
  }
  func.func @transform_3(%arg0: i32, %arg1: i32) -> (i32, i32) {
    %c0_i32 = arith.constant 0 : i32
    %c0_i32_0 = arith.constant 0 : i32
    %c0_i32_1 = arith.constant 0 : i32
    return %c0_i32, %c0_i32_0 : i32, i32
  }
  func.func @transform_4(%arg0: i32, %arg1: i32) -> (i32, i32, i32) {
    %c0_i32 = arith.constant 0 : i32
    %c0_i32_0 = arith.constant 0 : i32
    return %arg1, %arg0, %c0_i32 : i32, i32, i32
  }
}

</mosaic_0001>

<llo_original>
// kernel: a_call__.3
$region0: #{a_call__.3}
  #allocation0 [shape = 'u32[]', space=smem, size = 0x4, offset = 0x4, fixed_abs, tag = 'smem constant byte address 0x4 - core index']
  #allocation1 [shape = 'u32[144,128]{1,0:T(1,128)}', space=vmem, size = 0x12000, scoped, tag = 'internal scratch']
  #allocation2 [shape = 'f32[16,128]{1,0:T(8,128)}', space=vmem, size = 0x2000, scoped, tag = 'scratch operand']
  #allocation3 [shape = 'f32[8,16,128]{2,1,0:T(8,128)}', space=vmem, size = 0x10000, scoped, tag = 'scratch operand']
  %s0 = inlined_call_operand.vmem [shape: bf16[8,16,128], index: 0, kind: input, shape index: {}]
  %s1 = inlined_call_operand.vmem [shape: bf16[128,128], index: 1, kind: input, shape index: {}]
  %s2 = inlined_call_operand.vmem [shape: bf16[128,128], index: 2, kind: input, shape index: {}]
  %s3 = inlined_call_operand.vmem [shape: f32[1,128], index: 3, kind: input, shape index: {}]
  %s4 = inlined_call_operand.vmem [shape: f32[16,128], index: 4, kind: output, shape index: {}]
  %s5 = sld [smem:[#allocation0]]
  $region34: #{a_call__.3} parent=0
    _
  %s7 = ssub.s32 1, %s5
  %s8 = scalar_select 0, %s7, %s5
  // Predicated region
  $region2: #{a_call__.3} parent=0 // pred_check
    _
  $region3: #{a_call__.3} parent=0 // pred_check_branch
    %10 = sbr.rel (0) target = $region5
  $region4: #{a_call__.3} parent=0 // pred_region
    _
  $region5: #{a_call__.3} parent=0 // pred_fallthru
    _
  // Predicated region
  $region6: #{a_call__.3} parent=0 // pred_check
    _
  $region7: #{a_call__.3} parent=0 // pred_check_branch
    %12 = sbr.rel (0) target = $region9
  $region8: #{a_call__.3} parent=0 // pred_region
    _
  $region9: #{a_call__.3} parent=0 // pred_fallthru
    _
  // Predicated region
  $region10: #{a_call__.3} parent=0 // pred_check
    _
  $region11: #{a_call__.3} parent=0 // pred_check_branch
    %14 = sbr.rel (0) target = $region13
  $region12: #{a_call__.3} parent=0 // pred_region
    _
  $region13: #{a_call__.3} parent=0 // pred_fallthru
    _
  // Predicated region
  $region14: #{a_call__.3} parent=0 // pred_check
    _
  $region15: #{a_call__.3} parent=0 // pred_check_branch
    %16 = sbr.rel (0) target = $region17
  $region16: #{a_call__.3} parent=0 // pred_region
    _
  $region17: #{a_call__.3} parent=0 // pred_fallthru
    _
  %p18 = scmp.eq.s32.totalorder 0, 0
  // Predicated region
  $region18: #{a_call__.3} parent=0 // pred_check
    %p19 = pneg %p18
  $region19: #{a_call__.3} parent=0 // pred_check_branch
    %21 = sbr.rel (%p19) target = $region21
  $region20: #{a_call__.3} parent=0 // pred_region
    %22 = vst [vmem:[#allocation2] sm:$0xff] 0.0
    %23 = vst [vmem:[#allocation2 + $0x8] sm:$0xff] 0.0
  $region21: #{a_call__.3} parent=0 // pred_fallthru
    _
  %v24 = vld [vmem:[%s0] sm:$0xf]
  %v25 = vld [vmem:[%s0 + $0x4] sm:$0xf]
  %v26 = vld [vmem:[%s0 + $0x8] sm:$0xf]
  %v27 = vld [vmem:[%s0 + $0xc] sm:$0xf]
  %v28 = vld [vmem:[%s0 + $0x10] sm:$0xf]
  %v29 = vld [vmem:[%s0 + $0x14] sm:$0xf]
  %v30 = vld [vmem:[%s0 + $0x18] sm:$0xf]
  %v31 = vld [vmem:[%s0 + $0x1c] sm:$0xf]
  %v32 = vld [vmem:[%s0 + $0x20] sm:$0xf]
  %v33 = vld [vmem:[%s0 + $0x24] sm:$0xf]
  %v34 = vld [vmem:[%s0 + $0x28] sm:$0xf]
  %v35 = vld [vmem:[%s0 + $0x2c] sm:$0xf]
  %v36 = vld [vmem:[%s0 + $0x30] sm:$0xf]
  %v37 = vld [vmem:[%s0 + $0x34] sm:$0xf]
  %v38 = vld [vmem:[%s0 + $0x38] sm:$0xf]
  %v39 = vld [vmem:[%s0 + $0x3c] sm:$0xf]
  %v40 = vld [vmem:[%s1] sm:$0xf]
  %v41 = vld [vmem:[%s1 + $0x4] sm:$0xf]
  %v42 = vld [vmem:[%s1 + $0x8] sm:$0xf]
  %v43 = vld [vmem:[%s1 + $0xc] sm:$0xf]
  %v44 = vld [vmem:[%s1 + $0x10] sm:$0xf]
  %v45 = vld [vmem:[%s1 + $0x14] sm:$0xf]
  %v46 = vld [vmem:[%s1 + $0x18] sm:$0xf]
  %v47 = vld [vmem:[%s1 + $0x1c] sm:$0xf]
  %v48 = vld [vmem:[%s1 + $0x20] sm:$0xf]
  %v49 = vld [vmem:[%s1 + $0x24] sm:$0xf]
  %v50 = vld [vmem:[%s1 + $0x28] sm:$0xf]
  %v51 = vld [vmem:[%s1 + $0x2c] sm:$0xf]
  %v52 = vld [vmem:[%s1 + $0x30] sm:$0xf]
  %v53 = vld [vmem:[%s1 + $0x34] sm:$0xf]
  %v54 = vld [vmem:[%s1 + $0x38] sm:$0xf]
  %v55 = vld [vmem:[%s1 + $0x3c] sm:$0xf]
  %v56 = vld [vmem:[%s3] sm:$0x1]
  %v58 = vlaneseq
  %v59 = vshrl.u32 %v58, 7
  %v60 = vsub.s32 0, %v59
  %v61 = vrot.slane %v56, %v60
  %v79 = vunpack.c.l.b16 %v24
  %v80 = vunpack.c.l.b16 %v25
  %v81 = vunpack.c.l.b16 %v26
  %v82 = vunpack.c.l.b16 %v27
  %v83 = vunpack.c.l.b16 %v28
  %v84 = vunpack.c.l.b16 %v29
  %v85 = vunpack.c.l.b16 %v30
  %v86 = vunpack.c.l.b16 %v31
  %v87 = vunpack.c.l.b16 %v32
  %v88 = vunpack.c.l.b16 %v33
  %v89 = vunpack.c.l.b16 %v34
  %v90 = vunpack.c.l.b16 %v35
  %v91 = vunpack.c.l.b16 %v36
  %v92 = vunpack.c.l.b16 %v37
  %v93 = vunpack.c.l.b16 %v38
  %v94 = vunpack.c.l.b16 %v39
  %v95 = vpack.c.b16 %v80, %v79
  %v96 = vpack.c.b16 %v82, %v81
  %v97 = vpack.c.b16 %v84, %v83
  %v98 = vpack.c.b16 %v86, %v85
  %v99 = vpack.c.b16 %v88, %v87
  %v100 = vpack.c.b16 %v90, %v89
  %v101 = vpack.c.b16 %v92, %v91
  %v102 = vpack.c.b16 %v94, %v93
  %v127 = vunpack.c.l.b16 %v40
  %v128 = vunpack.c.l.b16 %v41
  %v129 = vunpack.c.l.b16 %v42
  %v130 = vunpack.c.l.b16 %v43
  %v131 = vunpack.c.l.b16 %v44
  %v132 = vunpack.c.l.b16 %v45
  %v133 = vunpack.c.l.b16 %v46
  %v134 = vunpack.c.l.b16 %v47
  %v135 = vunpack.c.l.b16 %v48
  %v136 = vunpack.c.l.b16 %v49
  %v137 = vunpack.c.l.b16 %v50
  %v138 = vunpack.c.l.b16 %v51
  %v139 = vunpack.c.l.b16 %v52
  %v140 = vunpack.c.l.b16 %v53
  %v141 = vunpack.c.l.b16 %v54
  %v142 = vunpack.c.l.b16 %v55
  %v143 = vpack.c.b16 %v128, %v127
  %v144 = vpack.c.b16 %v130, %v129
  %v145 = vpack.c.b16 %v132, %v131
  %v146 = vpack.c.b16 %v134, %v133
  %v147 = vpack.c.b16 %v136, %v135
  %v148 = vpack.c.b16 %v138, %v137
  %v149 = vpack.c.b16 %v140, %v139
  %v150 = vpack.c.b16 %v142, %v141
  %159 = vmatprep.subr.bf16.mxu0 0
  %160 = vmatpush1.bf16.msra.mxu0 %v143
  %161 = vmatprep.subr.bf16.mxu0 0
  %162 = vmatpush1.bf16.msra.mxu0 %v144
  %163 = vmatprep.subr.bf16.mxu0 0
  %164 = vmatpush1.bf16.msra.mxu0 %v145
  %165 = vmatprep.subr.bf16.mxu0 0
  %166 = vmatpush1.bf16.msra.mxu0 %v146
  %167 = vmatprep.subr.bf16.mxu0 0
  %168 = vmatpush1.bf16.msra.mxu0 %v147
  %169 = vmatprep.subr.bf16.mxu0 0
  %170 = vmatpush1.bf16.msra.mxu0 %v148
  %171 = vmatprep.subr.bf16.mxu0 0
  %172 = vmatpush1.bf16.msra.mxu0 %v149
  %173 = vmatprep.subr.bf16.mxu0 0
  %174 = vmatpush1.bf16.msra.mxu0 %v150
  %175 = vmatprep.subr.bf16.mxu0 0
  %176 = vmatpush1.bf16.msra.mxu0 0
  %177 = vmatprep.subr.bf16.mxu0 0
  %178 = vmatpush1.bf16.msra.mxu0 0
  %179 = vmatprep.subr.bf16.mxu0 0
  %180 = vmatpush1.bf16.msra.mxu0 0
  %181 = vmatprep.subr.bf16.mxu0 0
  %182 = vmatpush1.bf16.msra.mxu0 0
  %183 = vmatprep.subr.bf16.mxu0 0
  %184 = vmatpush1.bf16.msra.mxu0 0
  %185 = vmatprep.subr.bf16.mxu0 0
  %186 = vmatpush1.bf16.msra.mxu0 0
  %187 = vmatprep.subr.bf16.mxu0 0
  %188 = vmatpush1.bf16.msra.mxu0 0
  %189 = vmatprep.subr.bf16.mxu0 0
  %190 = vmatpush1.bf16.msra.mxu0 0
  %191 = vmatprep.mubr.bf16.mxu0 0
  %192 = vmatmul.mubr.bf16.gmra.mrb[0].mxu0 %v95
  %v193 = vpop.f32.mrb[0].mxu0
  %v194 = vadd.f32 %v61, %v193
  %v195 = vpop.f32.mrb[0].mxu0
  %v196 = vpop.f32.mrb[0].mxu0
  %v197 = vadd.f32 %v61, %v196
  %v198 = vpop.f32.mrb[0].mxu0
  %199 = vmatprep.mubr.bf16.mxu0 0
  %200 = vmatmul.mubr.bf16.gmra.mrb[0].mxu0 %v96
  %v201 = vpop.f32.mrb[0].mxu0
  %v202 = vadd.f32 %v61, %v201
  %v203 = vpop.f32.mrb[0].mxu0
  %v204 = vpop.f32.mrb[0].mxu0
  %v205 = vadd.f32 %v61, %v204
  %v206 = vpop.f32.mrb[0].mxu0
  %207 = vmatprep.mubr.bf16.mxu0 0
  %208 = vmatmul.mubr.bf16.gmra.mrb[0].mxu0 %v97
  %v209 = vpop.f32.mrb[0].mxu0
  %v210 = vadd.f32 %v61, %v209
  %v211 = vpop.f32.mrb[0].mxu0
  %v212 = vpop.f32.mrb[0].mxu0
  %v213 = vadd.f32 %v61, %v212
  %v214 = vpop.f32.mrb[0].mxu0
  %215 = vmatprep.mubr.bf16.mxu0 0
  %216 = vmatmul.mubr.bf16.gmra.mrb[0].mxu0 %v98
  %v217 = vpop.f32.mrb[0].mxu0
  %v218 = vadd.f32 %v61, %v217
  %v219 = vpop.f32.mrb[0].mxu0
  %v220 = vpop.f32.mrb[0].mxu0
  %v221 = vadd.f32 %v61, %v220
  %v222 = vpop.f32.mrb[0].mxu0
  %223 = vmatprep.mubr.bf16.mxu0 0
  %224 = vmatmul.mubr.bf16.gmra.mrb[0].mxu0 %v99
  %v225 = vpop.f32.mrb[0].mxu0
  %v226 = vadd.f32 %v61, %v225
  %v227 = vpop.f32.mrb[0].mxu0
  %v228 = vpop.f32.mrb[0].mxu0
  %v229 = vadd.f32 %v61, %v228
  %v230 = vpop.f32.mrb[0].mxu0
  %231 = vmatprep.mubr.bf16.mxu0 0
  %232 = vmatmul.mubr.bf16.gmra.mrb[0].mxu0 %v100
  %v233 = vpop.f32.mrb[0].mxu0
  %v234 = vadd.f32 %v61, %v233
  %v235 = vpop.f32.mrb[0].mxu0
  %v236 = vpop.f32.mrb[0].mxu0
  %v237 = vadd.f32 %v61, %v236
  %v238 = vpop.f32.mrb[0].mxu0
  %239 = vmatprep.mubr.bf16.mxu0 0
  %240 = vmatmul.mubr.bf16.gmra.mrb[0].mxu0 %v101
  %v241 = vpop.f32.mrb[0].mxu0
  %v242 = vadd.f32 %v61, %v241
  %v243 = vpop.f32.mrb[0].mxu0
  %v244 = vpop.f32.mrb[0].mxu0
  %v245 = vadd.f32 %v61, %v244
  %v246 = vpop.f32.mrb[0].mxu0
  %247 = vmatprep.mubr.bf16.mxu0 0
  %248 = vmatmul.mubr.bf16.gmra.mrb[0].mxu0 %v102
  %v249 = vpop.f32.mrb[0].mxu0
  %v250 = vadd.f32 %v61, %v249
  %v251 = vpop.f32.mrb[0].mxu0
  %v252 = vpop.f32.mrb[0].mxu0
  %v253 = vadd.f32 %v61, %v252
  %v254 = vpop.f32.mrb[0].mxu0
  %255 = vdwg.mxu0
  %256 = vst [vmem:[#allocation3] sm:$0xff] %v194
  %257 = vst [vmem:[#allocation3 + $0x8] sm:$0xff] %v197
  %258 = vst [vmem:[#allocation3 + $0x10] sm:$0xff] %v202
  %259 = vst [vmem:[#allocation3 + $0x18] sm:$0xff] %v205
  %260 = vst [vmem:[#allocation3 + $0x20] sm:$0xff] %v210
  %261 = vst [vmem:[#allocation3 + $0x28] sm:$0xff] %v213
  %262 = vst [vmem:[#allocation3 + $0x30] sm:$0xff] %v218
  %263 = vst [vmem:[#allocation3 + $0x38] sm:$0xff] %v221
  %264 = vst [vmem:[#allocation3 + $0x40] sm:$0xff] %v226
  %265 = vst [vmem:[#allocation3 + $0x48] sm:$0xff] %v229
  %266 = vst [vmem:[#allocation3 + $0x50] sm:$0xff] %v234
  %267 = vst [vmem:[#allocation3 + $0x58] sm:$0xff] %v237
  %268 = vst [vmem:[#allocation3 + $0x60] sm:$0xff] %v242
  %269 = vst [vmem:[#allocation3 + $0x68] sm:$0xff] %v245
  %270 = vst [vmem:[#allocation3 + $0x70] sm:$0xff] %v250
  %271 = vst [vmem:[#allocation3 + $0x78] sm:$0xff] %v253
  %v272 = vld [vmem:[%s2] sm:$0xf]
  %v273 = vld [vmem:[%s2 + $0x4] sm:$0xf]
  %v274 = vld [vmem:[%s2 + $0x8] sm:$0xf]
  %v275 = vld [vmem:[%s2 + $0xc] sm:$0xf]
  %v276 = vld [vmem:[%s2 + $0x10] sm:$0xf]
  %v277 = vld [vmem:[%s2 + $0x14] sm:$0xf]
  %v278 = vld [vmem:[%s2 + $0x18] sm:$0xf]
  %v279 = vld [vmem:[%s2 + $0x1c] sm:$0xf]
  %v280 = vld [vmem:[%s2 + $0x20] sm:$0xf]
  %v281 = vld [vmem:[%s2 + $0x24] sm:$0xf]
  %v282 = vld [vmem:[%s2 + $0x28] sm:$0xf]
  %v283 = vld [vmem:[%s2 + $0x2c] sm:$0xf]
  %v284 = vld [vmem:[%s2 + $0x30] sm:$0xf]
  %v285 = vld [vmem:[%s2 + $0x34] sm:$0xf]
  %v286 = vld [vmem:[%s2 + $0x38] sm:$0xf]
  %v287 = vld [vmem:[%s2 + $0x3c] sm:$0xf]
  %v288 = vld [vmem:[#allocation2] sm:$0xff]
  %v289 = vld [vmem:[#allocation2 + $0x8] sm:$0xff]
  %v290 = vld [vmem:[#allocation3] sm:$0xff]
  %v291 = vld [vmem:[#allocation3 + $0x8] sm:$0xff]
  %v292 = vpack.c.bf16 %v289, %v288
  %v309 = vunpack.c.l.b16 %v272
  %v310 = vunpack.c.l.b16 %v273
  %v311 = vunpack.c.l.b16 %v274
  %v312 = vunpack.c.l.b16 %v275
  %v313 = vunpack.c.l.b16 %v276
  %v314 = vunpack.c.l.b16 %v277
  %v315 = vunpack.c.l.b16 %v278
  %v316 = vunpack.c.l.b16 %v279
  %v317 = vunpack.c.l.b16 %v280
  %v318 = vunpack.c.l.b16 %v281
  %v319 = vunpack.c.l.b16 %v282
  %v320 = vunpack.c.l.b16 %v283
  %v321 = vunpack.c.l.b16 %v284
  %v322 = vunpack.c.l.b16 %v285
  %v323 = vunpack.c.l.b16 %v286
  %v324 = vunpack.c.l.b16 %v287
  %v325 = vpack.c.b16 %v310, %v309
  %v326 = vpack.c.b16 %v312, %v311
  %v327 = vpack.c.b16 %v314, %v313
  %v328 = vpack.c.b16 %v316, %v315
  %v329 = vpack.c.b16 %v318, %v317
  %v330 = vpack.c.b16 %v320, %v319
  %v331 = vpack.c.b16 %v322, %v321
  %v332 = vpack.c.b16 %v324, %v323
  %341 = vmatprep.subr.bf16.mxu0 0
  %342 = vmatpush1.bf16.msra.mxu0 %v325
  %343 = vmatprep.subr.bf16.mxu0 0
  %344 = vmatpush1.bf16.msra.mxu0 %v326
  %345 = vmatprep.subr.bf16.mxu0 0
  %346 = vmatpush1.bf16.msra.mxu0 %v327
  %347 = vmatprep.subr.bf16.mxu0 0
  %348 = vmatpush1.bf16.msra.mxu0 %v328
  %349 = vmatprep.subr.bf16.mxu0 0
  %350 = vmatpush1.bf16.msra.mxu0 %v329
  %351 = vmatprep.subr.bf16.mxu0 0
  %352 = vmatpush1.bf16.msra.mxu0 %v330
  %353 = vmatprep.subr.bf16.mxu0 0
  %354 = vmatpush1.bf16.msra.mxu0 %v331
  %355 = vmatprep.subr.bf16.mxu0 0
  %356 = vmatpush1.bf16.msra.mxu0 %v332
  %357 = vmatprep.subr.bf16.mxu0 0
  %358 = vmatpush1.bf16.msra.mxu0 0
  %359 = vmatprep.subr.bf16.mxu0 0
  %360 = vmatpush1.bf16.msra.mxu0 0
  %361 = vmatprep.subr.bf16.mxu0 0
  %362 = vmatpush1.bf16.msra.mxu0 0
  %363 = vmatprep.subr.bf16.mxu0 0
  %364 = vmatpush1.bf16.msra.mxu0 0
  %365 = vmatprep.subr.bf16.mxu0 0
  %366 = vmatpush1.bf16.msra.mxu0 0
  %367 = vmatprep.subr.bf16.mxu0 0
  %368 = vmatpush1.bf16.msra.mxu0 0
  %369 = vmatprep.subr.bf16.mxu0 0
  %370 = vmatpush1.bf16.msra.mxu0 0
  %371 = vmatprep.subr.bf16.mxu0 0
  %372 = vmatpush1.bf16.msra.mxu0 0
  %373 = vmatprep.mubr.bf16.mxu0 0
  %374 = vmatmul.mubr.bf16.gmra.mrb[0].mxu0 %v292
  %v375 = vpop.f32.mrb[0].mxu0
  %v376 = vadd.f32 0.0, %v375
  %v377 = vpop.f32.mrb[0].mxu0
  %v378 = vpop.f32.mrb[0].mxu0
  %v379 = vadd.f32 0.0, %v378
  %v380 = vpop.f32.mrb[0].mxu0
  %381 = vdwg.mxu0
  %v382 = vadd.f32 %v290, %v376
  %v383 = vadd.f32 %v291, %v379
  %v384 = vtanh.pop %v382
  %v385 = vtanh.pop %v383
  %s386 = scalar_lea.vmem [#allocation3], 16
  %v387 = vld [vmem:[%s386] sm:$0xff]
  %v388 = vld [vmem:[%s386 + $0x8] sm:$0xff]
  %v389 = vpack.c.bf16 %v385, %v384
  %390 = vmatprep.subr.bf16.mxu0 0
  %391 = vmatpush1.bf16.msra.mxu0 %v325
  %392 = vmatprep.subr.bf16.mxu0 0
  %393 = vmatpush1.bf16.msra.mxu0 %v326
  %394 = vmatprep.subr.bf16.mxu0 0
  %395 = vmatpush1.bf16.msra.mxu0 %v327
  %396 = vmatprep.subr.bf16.mxu0 0
  %397 = vmatpush1.bf16.msra.mxu0 %v328
  %398 = vmatprep.subr.bf16.mxu0 0
  %399 = vmatpush1.bf16.msra.mxu0 %v329
  %400 = vmatprep.subr.bf16.mxu0 0
  %401 = vmatpush1.bf16.msra.mxu0 %v330
  %402 = vmatprep.subr.bf16.mxu0 0
  %403 = vmatpush1.bf16.msra.mxu0 %v331
  %404 = vmatprep.subr.bf16.mxu0 0
  %405 = vmatpush1.bf16.msra.mxu0 %v332
  %406 = vmatprep.subr.bf16.mxu0 0
  %407 = vmatpush1.bf16.msra.mxu0 0
  %408 = vmatprep.subr.bf16.mxu0 0
  %409 = vmatpush1.bf16.msra.mxu0 0
  %410 = vmatprep.subr.bf16.mxu0 0
  %411 = vmatpush1.bf16.msra.mxu0 0
  %412 = vmatprep.subr.bf16.mxu0 0
  %413 = vmatpush1.bf16.msra.mxu0 0
  %414 = vmatprep.subr.bf16.mxu0 0
  %415 = vmatpush1.bf16.msra.mxu0 0
  %416 = vmatprep.subr.bf16.mxu0 0
  %417 = vmatpush1.bf16.msra.mxu0 0
  %418 = vmatprep.subr.bf16.mxu0 0
  %419 = vmatpush1.bf16.msra.mxu0 0
  %420 = vmatprep.subr.bf16.mxu0 0
  %421 = vmatpush1.bf16.msra.mxu0 0
  %422 = vmatprep.mubr.bf16.mxu0 0
  %423 = vmatmul.mubr.bf16.gmra.mrb[0].mxu0 %v389
  %v424 = vpop.f32.mrb[0].mxu0
  %v425 = vadd.f32 0.0, %v424
  %v426 = vpop.f32.mrb[0].mxu0
  %v427 = vpop.f32.mrb[0].mxu0
  %v428 = vadd.f32 0.0, %v427
  %v429 = vpop.f32.mrb[0].mxu0
  %430 = vdwg.mxu0
  %v431 = vadd.f32 %v387, %v425
  %v432 = vadd.f32 %v388, %v428
  %v433 = vtanh.pop %v431
  %v434 = vtanh.pop %v432
  %s435 = scalar_lea.vmem [#allocation3], 32
  %v436 = vld [vmem:[%s435] sm:$0xff]
  %v437 = vld [vmem:[%s435 + $0x8] sm:$0xff]
  %v438 = vpack.c.bf16 %v434, %v433
  %439 = vmatprep.subr.bf16.mxu0 0
  %440 = vmatpush1.bf16.msra.mxu0 %v325
  %441 = vmatprep.subr.bf16.mxu0 0
  %442 = vmatpush1.bf16.msra.mxu0 %v326
  %443 = vmatprep.subr.bf16.mxu0 0
  %444 = vmatpush1.bf16.msra.mxu0 %v327
  %445 = vmatprep.subr.bf16.mxu0 0
  %446 = vmatpush1.bf16.msra.mxu0 %v328
  %447 = vmatprep.subr.bf16.mxu0 0
  %448 = vmatpush1.bf16.msra.mxu0 %v329
  %449 = vmatprep.subr.bf16.mxu0 0
  %450 = vmatpush1.bf16.msra.mxu0 %v330
  %451 = vmatprep.subr.bf16.mxu0 0
  %452 = vmatpush1.bf16.msra.mxu0 %v331
  %453 = vmatprep.subr.bf16.mxu0 0
  %454 = vmatpush1.bf16.msra.mxu0 %v332
  %455 = vmatprep.subr.bf16.mxu0 0
  %456 = vmatpush1.bf16.msra.mxu0 0
  %457 = vmatprep.subr.bf16.mxu0 0
  %458 = vmatpush1.bf16.msra.mxu0 0
  %459 = vmatprep.subr.bf16.mxu0 0
  %460 = vmatpush1.bf16.msra.mxu0 0
  %461 = vmatprep.subr.bf16.mxu0 0
  %462 = vmatpush1.bf16.msra.mxu0 0
  %463 = vmatprep.subr.bf16.mxu0 0
  %464 = vmatpush1.bf16.msra.mxu0 0
  %465 = vmatprep.subr.bf16.mxu0 0
  %466 = vmatpush1.bf16.msra.mxu0 0
  %467 = vmatprep.subr.bf16.mxu0 0
  %468 = vmatpush1.bf16.msra.mxu0 0
  %469 = vmatprep.subr.bf16.mxu0 0
  %470 = vmatpush1.bf16.msra.mxu0 0
  %471 = vmatprep.mubr.bf16.mxu0 0
  %472 = vmatmul.mubr.bf16.gmra.mrb[0].mxu0 %v438
  %v473 = vpop.f32.mrb[0].mxu0
  %v474 = vadd.f32 0.0, %v473
  %v475 = vpop.f32.mrb[0].mxu0
  %v476 = vpop.f32.mrb[0].mxu0
  %v477 = vadd.f32 0.0, %v476
  %v478 = vpop.f32.mrb[0].mxu0
  %479 = vdwg.mxu0
  %v480 = vadd.f32 %v436, %v474
  %v481 = vadd.f32 %v437, %v477
  %v482 = vtanh.pop %v480
  %v483 = vtanh.pop %v481
  %s484 = scalar_lea.vmem [#allocation3], 48
  %v485 = vld [vmem:[%s484] sm:$0xff]
  %v486 = vld [vmem:[%s484 + $0x8] sm:$0xff]
  %v487 = vpack.c.bf16 %v483, %v482
  %488 = vmatprep.subr.bf16.mxu0 0
  %489 = vmatpush1.bf16.msra.mxu0 %v325
  %490 = vmatprep.subr.bf16.mxu0 0
  %491 = vmatpush1.bf16.msra.mxu0 %v326
  %492 = vmatprep.subr.bf16.mxu0 0
  %493 = vmatpush1.bf16.msra.mxu0 %v327
  %494 = vmatprep.subr.bf16.mxu0 0
  %495 = vmatpush1.bf16.msra.mxu0 %v328
  %496 = vmatprep.subr.bf16.mxu0 0
  %497 = vmatpush1.bf16.msra.mxu0 %v329
  %498 = vmatprep.subr.bf16.mxu0 0
  %499 = vmatpush1.bf16.msra.mxu0 %v330
  %500 = vmatprep.subr.bf16.mxu0 0
  %501 = vmatpush1.bf16.msra.mxu0 %v331
  %502 = vmatprep.subr.bf16.mxu0 0
  %503 = vmatpush1.bf16.msra.mxu0 %v332
  %504 = vmatprep.subr.bf16.mxu0 0
  %505 = vmatpush1.bf16.msra.mxu0 0
  %506 = vmatprep.subr.bf16.mxu0 0
  %507 = vmatpush1.bf16.msra.mxu0 0
  %508 = vmatprep.subr.bf16.mxu0 0
  %509 = vmatpush1.bf16.msra.mxu0 0
  %510 = vmatprep.subr.bf16.mxu0 0
  %511 = vmatpush1.bf16.msra.mxu0 0
  %512 = vmatprep.subr.bf16.mxu0 0
  %513 = vmatpush1.bf16.msra.mxu0 0
  %514 = vmatprep.subr.bf16.mxu0 0
  %515 = vmatpush1.bf16.msra.mxu0 0
  %516 = vmatprep.subr.bf16.mxu0 0
  %517 = vmatpush1.bf16.msra.mxu0 0
  %518 = vmatprep.subr.bf16.mxu0 0
  %519 = vmatpush1.bf16.msra.mxu0 0
  %520 = vmatprep.mubr.bf16.mxu0 0
  %521 = vmatmul.mubr.bf16.gmra.mrb[0].mxu0 %v487
  %v522 = vpop.f32.mrb[0].mxu0
  %v523 = vadd.f32 0.0, %v522
  %v524 = vpop.f32.mrb[0].mxu0
  %v525 = vpop.f32.mrb[0].mxu0
  %v526 = vadd.f32 0.0, %v525
  %v527 = vpop.f32.mrb[0].mxu0
  %528 = vdwg.mxu0
  %v529 = vadd.f32 %v485, %v523
  %v530 = vadd.f32 %v486, %v526
  %v531 = vtanh.pop %v529
  %v532 = vtanh.pop %v530
  %s533 = scalar_lea.vmem [#allocation3], 64
  %v534 = vld [vmem:[%s533] sm:$0xff]
  %v535 = vld [vmem:[%s533 + $0x8] sm:$0xff]
  %v536 = vpack.c.bf16 %v532, %v531
  %537 = vmatprep.subr.bf16.mxu0 0
  %538 = vmatpush1.bf16.msra.mxu0 %v325
  %539 = vmatprep.subr.bf16.mxu0 0
  %540 = vmatpush1.bf16.msra.mxu0 %v326
  %541 = vmatprep.subr.bf16.mxu0 0
  %542 = vmatpush1.bf16.msra.mxu0 %v327
  %543 = vmatprep.subr.bf16.mxu0 0
  %544 = vmatpush1.bf16.msra.mxu0 %v328
  %545 = vmatprep.subr.bf16.mxu0 0
  %546 = vmatpush1.bf16.msra.mxu0 %v329
  %547 = vmatprep.subr.bf16.mxu0 0
  %548 = vmatpush1.bf16.msra.mxu0 %v330
  %549 = vmatprep.subr.bf16.mxu0 0
  %550 = vmatpush1.bf16.msra.mxu0 %v331
  %551 = vmatprep.subr.bf16.mxu0 0
  %552 = vmatpush1.bf16.msra.mxu0 %v332
  %553 = vmatprep.subr.bf16.mxu0 0
  %554 = vmatpush1.bf16.msra.mxu0 0
  %555 = vmatprep.subr.bf16.mxu0 0
  %556 = vmatpush1.bf16.msra.mxu0 0
  %557 = vmatprep.subr.bf16.mxu0 0
  %558 = vmatpush1.bf16.msra.mxu0 0
  %559 = vmatprep.subr.bf16.mxu0 0
  %560 = vmatpush1.bf16.msra.mxu0 0
  %561 = vmatprep.subr.bf16.mxu0 0
  %562 = vmatpush1.bf16.msra.mxu0 0
  %563 = vmatprep.subr.bf16.mxu0 0
  %564 = vmatpush1.bf16.msra.mxu0 0
  %565 = vmatprep.subr.bf16.mxu0 0
  %566 = vmatpush1.bf16.msra.mxu0 0
  %567 = vmatprep.subr.bf16.mxu0 0
  %568 = vmatpush1.bf16.msra.mxu0 0
  %569 = vmatprep.mubr.bf16.mxu0 0
  %570 = vmatmul.mubr.bf16.gmra.mrb[0].mxu0 %v536
  %v571 = vpop.f32.mrb[0].mxu0
  %v572 = vadd.f32 0.0, %v571
  %v573 = vpop.f32.mrb[0].mxu0
  %v574 = vpop.f32.mrb[0].mxu0
  %v575 = vadd.f32 0.0, %v574
  %v576 = vpop.f32.mrb[0].mxu0
  %577 = vdwg.mxu0
  %v578 = vadd.f32 %v534, %v572
  %v579 = vadd.f32 %v535, %v575
  %v580 = vtanh.pop %v578
  %v581 = vtanh.pop %v579
  %s582 = scalar_lea.vmem [#allocation3], 80
  %v583 = vld [vmem:[%s582] sm:$0xff]
  %v584 = vld [vmem:[%s582 + $0x8] sm:$0xff]
  %v585 = vpack.c.bf16 %v581, %v580
  %586 = vmatprep.subr.bf16.mxu0 0
  %587 = vmatpush1.bf16.msra.mxu0 %v325
  %588 = vmatprep.subr.bf16.mxu0 0
  %589 = vmatpush1.bf16.msra.mxu0 %v326
  %590 = vmatprep.subr.bf16.mxu0 0
  %591 = vmatpush1.bf16.msra.mxu0 %v327
  %592 = vmatprep.subr.bf16.mxu0 0
  %593 = vmatpush1.bf16.msra.mxu0 %v328
  %594 = vmatprep.subr.bf16.mxu0 0
  %595 = vmatpush1.bf16.msra.mxu0 %v329
  %596 = vmatprep.subr.bf16.mxu0 0
  %597 = vmatpush1.bf16.msra.mxu0 %v330
  %598 = vmatprep.subr.bf16.mxu0 0
  %599 = vmatpush1.bf16.msra.mxu0 %v331
  %600 = vmatprep.subr.bf16.mxu0 0
  %601 = vmatpush1.bf16.msra.mxu0 %v332
  %602 = vmatprep.subr.bf16.mxu0 0
  %603 = vmatpush1.bf16.msra.mxu0 0
  %604 = vmatprep.subr.bf16.mxu0 0
  %605 = vmatpush1.bf16.msra.mxu0 0
  %606 = vmatprep.subr.bf16.mxu0 0
  %607 = vmatpush1.bf16.msra.mxu0 0
  %608 = vmatprep.subr.bf16.mxu0 0
  %609 = vmatpush1.bf16.msra.mxu0 0
  %610 = vmatprep.subr.bf16.mxu0 0
  %611 = vmatpush1.bf16.msra.mxu0 0
  %612 = vmatprep.subr.bf16.mxu0 0
  %613 = vmatpush1.bf16.msra.mxu0 0
  %614 = vmatprep.subr.bf16.mxu0 0
  %615 = vmatpush1.bf16.msra.mxu0 0
  %616 = vmatprep.subr.bf16.mxu0 0
  %617 = vmatpush1.bf16.msra.mxu0 0
  %618 = vmatprep.mubr.bf16.mxu0 0
  %619 = vmatmul.mubr.bf16.gmra.mrb[0].mxu0 %v585
  %v620 = vpop.f32.mrb[0].mxu0
  %v621 = vadd.f32 0.0, %v620
  %v622 = vpop.f32.mrb[0].mxu0
  %v623 = vpop.f32.mrb[0].mxu0
  %v624 = vadd.f32 0.0, %v623
  %v625 = vpop.f32.mrb[0].mxu0
  %626 = vdwg.mxu0
  %v627 = vadd.f32 %v583, %v621
  %v628 = vadd.f32 %v584, %v624
  %v629 = vtanh.pop %v627
  %v630 = vtanh.pop %v628
  %s631 = scalar_lea.vmem [#allocation3], 96
  %v632 = vld [vmem:[%s631] sm:$0xff]
  %v633 = vld [vmem:[%s631 + $0x8] sm:$0xff]
  %v634 = vpack.c.bf16 %v630, %v629
  %635 = vmatprep.subr.bf16.mxu0 0
  %636 = vmatpush1.bf16.msra.mxu0 %v325
  %637 = vmatprep.subr.bf16.mxu0 0
  %638 = vmatpush1.bf16.msra.mxu0 %v326
  %639 = vmatprep.subr.bf16.mxu0 0
  %640 = vmatpush1.bf16.msra.mxu0 %v327
  %641 = vmatprep.subr.bf16.mxu0 0
  %642 = vmatpush1.bf16.msra.mxu0 %v328
  %643 = vmatprep.subr.bf16.mxu0 0
  %644 = vmatpush1.bf16.msra.mxu0 %v329
  %645 = vmatprep.subr.bf16.mxu0 0
  %646 = vmatpush1.bf16.msra.mxu0 %v330
  %647 = vmatprep.subr.bf16.mxu0 0
  %648 = vmatpush1.bf16.msra.mxu0 %v331
  %649 = vmatprep.subr.bf16.mxu0 0
  %650 = vmatpush1.bf16.msra.mxu0 %v332
  %651 = vmatprep.subr.bf16.mxu0 0
  %652 = vmatpush1.bf16.msra.mxu0 0
  %653 = vmatprep.subr.bf16.mxu0 0
  %654 = vmatpush1.bf16.msra.mxu0 0
  %655 = vmatprep.subr.bf16.mxu0 0
  %656 = vmatpush1.bf16.msra.mxu0 0
  %657 = vmatprep.subr.bf16.mxu0 0
  %658 = vmatpush1.bf16.msra.mxu0 0
  %659 = vmatprep.subr.bf16.mxu0 0
  %660 = vmatpush1.bf16.msra.mxu0 0
  %661 = vmatprep.subr.bf16.mxu0 0
  %662 = vmatpush1.bf16.msra.mxu0 0
  %663 = vmatprep.subr.bf16.mxu0 0
  %664 = vmatpush1.bf16.msra.mxu0 0
  %665 = vmatprep.subr.bf16.mxu0 0
  %666 = vmatpush1.bf16.msra.mxu0 0
  %667 = vmatprep.mubr.bf16.mxu0 0
  %668 = vmatmul.mubr.bf16.gmra.mrb[0].mxu0 %v634
  %v669 = vpop.f32.mrb[0].mxu0
  %v670 = vadd.f32 0.0, %v669
  %v671 = vpop.f32.mrb[0].mxu0
  %v672 = vpop.f32.mrb[0].mxu0
  %v673 = vadd.f32 0.0, %v672
  %v674 = vpop.f32.mrb[0].mxu0
  %675 = vdwg.mxu0
  %v676 = vadd.f32 %v632, %v670
  %v677 = vadd.f32 %v633, %v673
  %v678 = vtanh.pop %v676
  %v679 = vtanh.pop %v677
  %s680 = scalar_lea.vmem [#allocation3], 112
  %v681 = vld [vmem:[%s680] sm:$0xff]
  %v682 = vld [vmem:[%s680 + $0x8] sm:$0xff]
  %v683 = vpack.c.bf16 %v679, %v678
  %684 = vmatprep.subr.bf16.mxu0 0
  %685 = vmatpush1.bf16.msra.mxu0 %v325
  %686 = vmatprep.subr.bf16.mxu0 0
  %687 = vmatpush1.bf16.msra.mxu0 %v326
  %688 = vmatprep.subr.bf16.mxu0 0
  %689 = vmatpush1.bf16.msra.mxu0 %v327
  %690 = vmatprep.subr.bf16.mxu0 0
  %691 = vmatpush1.bf16.msra.mxu0 %v328
  %692 = vmatprep.subr.bf16.mxu0 0
  %693 = vmatpush1.bf16.msra.mxu0 %v329
  %694 = vmatprep.subr.bf16.mxu0 0
  %695 = vmatpush1.bf16.msra.mxu0 %v330
  %696 = vmatprep.subr.bf16.mxu0 0
  %697 = vmatpush1.bf16.msra.mxu0 %v331
  %698 = vmatprep.subr.bf16.mxu0 0
  %699 = vmatpush1.bf16.msra.mxu0 %v332
  %700 = vmatprep.subr.bf16.mxu0 0
  %701 = vmatpush1.bf16.msra.mxu0 0
  %702 = vmatprep.subr.bf16.mxu0 0
  %703 = vmatpush1.bf16.msra.mxu0 0
  %704 = vmatprep.subr.bf16.mxu0 0
  %705 = vmatpush1.bf16.msra.mxu0 0
  %706 = vmatprep.subr.bf16.mxu0 0
  %707 = vmatpush1.bf16.msra.mxu0 0
  %708 = vmatprep.subr.bf16.mxu0 0
  %709 = vmatpush1.bf16.msra.mxu0 0
  %710 = vmatprep.subr.bf16.mxu0 0
  %711 = vmatpush1.bf16.msra.mxu0 0
  %712 = vmatprep.subr.bf16.mxu0 0
  %713 = vmatpush1.bf16.msra.mxu0 0
  %714 = vmatprep.subr.bf16.mxu0 0
  %715 = vmatpush1.bf16.msra.mxu0 0
  %716 = vmatprep.mubr.bf16.mxu0 0
  %717 = vmatmul.mubr.bf16.gmra.mrb[0].mxu0 %v683
  %v718 = vpop.f32.mrb[0].mxu0
  %v719 = vadd.f32 0.0, %v718
  %v720 = vpop.f32.mrb[0].mxu0
  %v721 = vpop.f32.mrb[0].mxu0
  %v722 = vadd.f32 0.0, %v721
  %v723 = vpop.f32.mrb[0].mxu0
  %724 = vdwg.mxu0
  %v725 = vadd.f32 %v681, %v719
  %v726 = vadd.f32 %v682, %v722
  %v727 = vtanh.pop %v725
  %v728 = vtanh.pop %v726
  %729 = vst [vmem:[#allocation2] sm:$0xff] %v727
  %730 = vst [vmem:[#allocation2 + $0x8] sm:$0xff] %v728
  // Predicated region
  $region22: #{a_call__.3} parent=0 // pred_check
    %p731 = pneg %p18
  $region23: #{a_call__.3} parent=0 // pred_check_branch
    %733 = sbr.rel (%p731) target = $region25
  $region24: #{a_call__.3} parent=0 // pred_region
    %v734 = vld [vmem:[#allocation2] sm:$0xff]
    %v735 = vld [vmem:[#allocation2 + $0x8] sm:$0xff]
    %736 = vst [vmem:[%s4] sm:$0xff] %v734
    %737 = vst [vmem:[%s4 + $0x8] sm:$0xff] %v735
  $region25: #{a_call__.3} parent=0 // pred_fallthru
    _
  // Predicated region
  $region26: #{a_call__.3} parent=0 // pred_check
    _
  $region27: #{a_call__.3} parent=0 // pred_check_branch
    %739 = sbr.rel (0) target = $region29
  $region28: #{a_call__.3} parent=0 // pred_region
    _
  $region29: #{a_call__.3} parent=0 // pred_fallthru
    _
  // Predicated region
  $region30: #{a_call__.3} parent=0 // pred_check
    _
  $region31: #{a_call__.3} parent=0 // pred_check_branch
    %741 = sbr.rel (0) target = $region33
  $region32: #{a_call__.3} parent=0 // pred_region
    _
  $region33: #{a_call__.3} parent=0 // pred_fallthru
    _

// kernel: a_call__.2
$region0: #{a_call__.2}
  #allocation0 [shape = 'u32[]', space=smem, size = 0x4, offset = 0x4, fixed_abs, tag = 'smem constant byte address 0x4 - core index']
  #allocation1 [shape = 'u32[144,128]{1,0:T(1,128)}', space=vmem, size = 0x12000, scoped, tag = 'internal scratch']
  #allocation2 [shape = 'f32[16,128]{1,0:T(8,128)}', space=vmem, size = 0x2000, scoped, tag = 'scratch operand']
  #allocation3 [shape = 'f32[8,16,128]{2,1,0:T(8,128)}', space=vmem, size = 0x10000, scoped, tag = 'scratch operand']
  %s0 = inlined_call_operand.vmem [shape: bf16[8,16,128], index: 0, kind: input, shape index: {}]
  %s1 = inlined_call_operand.hbm [shape: bf16[128,128], index: 1, kind: input, shape index: {}]
  %s2 = inlined_call_operand.vmem [shape: bf16[128,128], index: 2, kind: input, shape index: {}]
  %s3 = inlined_call_operand.vmem [shape: f32[1,128], index: 3, kind: input, shape index: {}]
  %s4 = inlined_call_operand.vmem [shape: bf16[8,16,128], index: 4, kind: output, shape index: {}]
  %s5 = sld [smem:[#allocation0]]
  $region34: #{a_call__.2} parent=0
    _
  %s7 = ssub.s32 1, %s5
  %s8 = scalar_select 0, %s7, %s5
  $region1: #{a_call__.2} parent=0
    #allocation4 [shape = 'u8[32768]{0}', space=vmem, size = 0x8000, scoped, tag = 'input window, operand 1, single buffered']
    #allocation5 [shape = 's32[1]{0}', space=sflag, size = 0x4, scoped, tag = 'scoped memory for a_call__.2']
    %9 = vsyncpa [#allocation5], 0
    // Predicated region
    $region2: #{a_call__.2} parent=1 // pred_check
      _
    $region3: #{a_call__.2} parent=1 // pred_check_branch
      %11 = sbr.rel (0) target = $region5
    $region4: #{a_call__.2} parent=1 // pred_region
      _
    $region5: #{a_call__.2} parent=1 // pred_fallthru
      _
    // Predicated region
    $region6: #{a_call__.2} parent=1 // pred_check
      _
    $region7: #{a_call__.2} parent=1 // pred_check_branch
      %13 = sbr.rel (0) target = $region9
    $region8: #{a_call__.2} parent=1 // pred_region
      %s15 = ssub.s32 1024, 1024
      %16 = vsyncadd [#allocation5], %s15
      %s17 = sshll.u32 [#allocation4], 4
      %s18 = int_to_ptr.vmem [resolvable:$true] %s17
      %23 = dma.hbm_to_vmem [thread:$0]  %s1, 1024, %s18, [#allocation5], 64, 64, 4
    $region9: #{a_call__.2} parent=1 // pred_fallthru
      _
    // Predicated region
    $region10: #{a_call__.2} parent=1 // pred_check
      _
    $region11: #{a_call__.2} parent=1 // pred_check_branch
      %25 = sbr.rel (0) target = $region13
    $region12: #{a_call__.2} parent=1 // pred_region
      _
    $region13: #{a_call__.2} parent=1 // pred_fallthru
      _
    // Predicated region
    $region14: #{a_call__.2} parent=1 // pred_check
      _
    $region15: #{a_call__.2} parent=1 // pred_check_branch
      %27 = sbr.rel (0) target = $region17
    $region16: #{a_call__.2} parent=1 // pred_region
      _
    $region17: #{a_call__.2} parent=1 // pred_fallthru
      _
    // Predicated region
    $region18: #{a_call__.2} parent=1 // pred_check
      _
    $region19: #{a_call__.2} parent=1 // pred_check_branch
      %29 = sbr.rel (0) target = $region21
    $region20: #{a_call__.2} parent=1 // pred_region
      %30 = dma.done [#allocation5], 1024
    $region21: #{a_call__.2} parent=1 // pred_fallthru
      _
    %p32 = scmp.eq.s32.totalorder 0, 0
    // Predicated region
    $region22: #{a_call__.2} parent=1 // pred_check
      %p33 = pneg %p32
    $region23: #{a_call__.2} parent=1 // pred_check_branch
      %35 = sbr.rel (%p33) target = $region25
    $region24: #{a_call__.2} parent=1 // pred_region
      %36 = vst [vmem:[#allocation2] sm:$0xff] 0.0
      %37 = vst [vmem:[#allocation2 + $0x8] sm:$0xff] 0.0
    $region25: #{a_call__.2} parent=1 // pred_fallthru
      _
    %v38 = vld [vmem:[%s0] sm:$0xf]
    %v39 = vld [vmem:[%s0 + $0x4] sm:$0xf]
    %v40 = vld [vmem:[%s0 + $0x8] sm:$0xf]
    %v41 = vld [vmem:[%s0 + $0xc] sm:$0xf]
    %v42 = vld [vmem:[%s0 + $0x10] sm:$0xf]
    %v43 = vld [vmem:[%s0 + $0x14] sm:$0xf]
    %v44 = vld [vmem:[%s0 + $0x18] sm:$0xf]
    %v45 = vld [vmem:[%s0 + $0x1c] sm:$0xf]
    %v46 = vld [vmem:[%s0 + $0x20] sm:$0xf]
    %v47 = vld [vmem:[%s0 + $0x24] sm:$0xf]
    %v48 = vld [vmem:[%s0 + $0x28] sm:$0xf]
    %v49 = vld [vmem:[%s0 + $0x2c] sm:$0xf]
    %v50 = vld [vmem:[%s0 + $0x30] sm:$0xf]
    %v51 = vld [vmem:[%s0 + $0x34] sm:$0xf]
    %v52 = vld [vmem:[%s0 + $0x38] sm:$0xf]
    %v53 = vld [vmem:[%s0 + $0x3c] sm:$0xf]
    %v54 = vld [vmem:[#allocation4] sm:$0xf]
    %v55 = vld [vmem:[#allocation4 + $0x4] sm:$0xf]
    %v56 = vld [vmem:[#allocation4 + $0x8] sm:$0xf]
    %v57 = vld [vmem:[#allocation4 + $0xc] sm:$0xf]
    %v58 = vld [vmem:[#allocation4 + $0x10] sm:$0xf]
    %v59 = vld [vmem:[#allocation4 + $0x14] sm:$0xf]
    %v60 = vld [vmem:[#allocation4 + $0x18] sm:$0xf]
    %v61 = vld [vmem:[#allocation4 + $0x1c] sm:$0xf]
    %v62 = vld [vmem:[#allocation4 + $0x20] sm:$0xf]
    %v63 = vld [vmem:[#allocation4 + $0x24] sm:$0xf]
    %v64 = vld [vmem:[#allocation4 + $0x28] sm:$0xf]
    %v65 = vld [vmem:[#allocation4 + $0x2c] sm:$0xf]
    %v66 = vld [vmem:[#allocation4 + $0x30] sm:$0xf]
    %v67 = vld [vmem:[#allocation4 + $0x34] sm:$0xf]
    %v68 = vld [vmem:[#allocation4 + $0x38] sm:$0xf]
    %v69 = vld [vmem:[#allocation4 + $0x3c] sm:$0xf]
    %v70 = vld [vmem:[%s3] sm:$0x1]
    %v72 = vlaneseq
    %v73 = vshrl.u32 %v72, 7
    %v74 = vsub.s32 0, %v73
    %v75 = vrot.slane %v70, %v74
    %v93 = vunpack.c.l.b16 %v38
    %v94 = vunpack.c.l.b16 %v39
    %v95 = vunpack.c.l.b16 %v40
    %v96 = vunpack.c.l.b16 %v41
    %v97 = vunpack.c.l.b16 %v42
    %v98 = vunpack.c.l.b16 %v43
    %v99 = vunpack.c.l.b16 %v44
    %v100 = vunpack.c.l.b16 %v45
    %v101 = vunpack.c.l.b16 %v46
    %v102 = vunpack.c.l.b16 %v47
    %v103 = vunpack.c.l.b16 %v48
    %v104 = vunpack.c.l.b16 %v49
    %v105 = vunpack.c.l.b16 %v50
    %v106 = vunpack.c.l.b16 %v51
    %v107 = vunpack.c.l.b16 %v52
    %v108 = vunpack.c.l.b16 %v53
    %v109 = vpack.c.b16 %v94, %v93
    %v110 = vpack.c.b16 %v96, %v95
    %v111 = vpack.c.b16 %v98, %v97
    %v112 = vpack.c.b16 %v100, %v99
    %v113 = vpack.c.b16 %v102, %v101
    %v114 = vpack.c.b16 %v104, %v103
    %v115 = vpack.c.b16 %v106, %v105
    %v116 = vpack.c.b16 %v108, %v107
    %v141 = vunpack.c.l.b16 %v54
    %v142 = vunpack.c.l.b16 %v55
    %v143 = vunpack.c.l.b16 %v56
    %v144 = vunpack.c.l.b16 %v57
    %v145 = vunpack.c.l.b16 %v58
    %v146 = vunpack.c.l.b16 %v59
    %v147 = vunpack.c.l.b16 %v60
    %v148 = vunpack.c.l.b16 %v61
    %v149 = vunpack.c.l.b16 %v62
    %v150 = vunpack.c.l.b16 %v63
    %v151 = vunpack.c.l.b16 %v64
    %v152 = vunpack.c.l.b16 %v65
    %v153 = vunpack.c.l.b16 %v66
    %v154 = vunpack.c.l.b16 %v67
    %v155 = vunpack.c.l.b16 %v68
    %v156 = vunpack.c.l.b16 %v69
    %v157 = vpack.c.b16 %v142, %v141
    %v158 = vpack.c.b16 %v144, %v143
    %v159 = vpack.c.b16 %v146, %v145
    %v160 = vpack.c.b16 %v148, %v147
    %v161 = vpack.c.b16 %v150, %v149
    %v162 = vpack.c.b16 %v152, %v151
    %v163 = vpack.c.b16 %v154, %v153
    %v164 = vpack.c.b16 %v156, %v155
    %173 = vmatprep.subr.bf16.mxu0 0
    %174 = vmatpush1.bf16.msra.mxu0 %v157
    %175 = vmatprep.subr.bf16.mxu0 0
    %176 = vmatpush1.bf16.msra.mxu0 %v158
    %177 = vmatprep.subr.bf16.mxu0 0
    %178 = vmatpush1.bf16.msra.mxu0 %v159
    %179 = vmatprep.subr.bf16.mxu0 0
    %180 = vmatpush1.bf16.msra.mxu0 %v160
    %181 = vmatprep.subr.bf16.mxu0 0
    %182 = vmatpush1.bf16.msra.mxu0 %v161
    %183 = vmatprep.subr.bf16.mxu0 0
    %184 = vmatpush1.bf16.msra.mxu0 %v162
    %185 = vmatprep.subr.bf16.mxu0 0
    %186 = vmatpush1.bf16.msra.mxu0 %v163
    %187 = vmatprep.subr.bf16.mxu0 0
    %188 = vmatpush1.bf16.msra.mxu0 %v164
    %189 = vmatprep.subr.bf16.mxu0 0
    %190 = vmatpush1.bf16.msra.mxu0 0
    %191 = vmatprep.subr.bf16.mxu0 0
    %192 = vmatpush1.bf16.msra.mxu0 0
    %193 = vmatprep.subr.bf16.mxu0 0
    %194 = vmatpush1.bf16.msra.mxu0 0
    %195 = vmatprep.subr.bf16.mxu0 0
    %196 = vmatpush1.bf16.msra.mxu0 0
    %197 = vmatprep.subr.bf16.mxu0 0
    %198 = vmatpush1.bf16.msra.mxu0 0
    %199 = vmatprep.subr.bf16.mxu0 0
    %200 = vmatpush1.bf16.msra.mxu0 0
    %201 = vmatprep.subr.bf16.mxu0 0
    %202 = vmatpush1.bf16.msra.mxu0 0
    %203 = vmatprep.subr.bf16.mxu0 0
    %204 = vmatpush1.bf16.msra.mxu0 0
    %205 = vmatprep.mubr.bf16.mxu0 0
    %206 = vmatmul.mubr.bf16.gmra.mrb[0].mxu0 %v109
    %v207 = vpop.f32.mrb[0].mxu0
    %v208 = vadd.f32 %v75, %v207
    %v209 = vpop.f32.mrb[0].mxu0
    %v210 = vpop.f32.mrb[0].mxu0
    %v211 = vadd.f32 %v75, %v210
    %v212 = vpop.f32.mrb[0].mxu0
    %213 = vmatprep.mubr.bf16.mxu0 0
    %214 = vmatmul.mubr.bf16.gmra.mrb[0].mxu0 %v110
    %v215 = vpop.f32.mrb[0].mxu0
    %v216 = vadd.f32 %v75, %v215
    %v217 = vpop.f32.mrb[0].mxu0
    %v218 = vpop.f32.mrb[0].mxu0
    %v219 = vadd.f32 %v75, %v218
    %v220 = vpop.f32.mrb[0].mxu0
    %221 = vmatprep.mubr.bf16.mxu0 0
    %222 = vmatmul.mubr.bf16.gmra.mrb[0].mxu0 %v111
    %v223 = vpop.f32.mrb[0].mxu0
    %v224 = vadd.f32 %v75, %v223
    %v225 = vpop.f32.mrb[0].mxu0
    %v226 = vpop.f32.mrb[0].mxu0
    %v227 = vadd.f32 %v75, %v226
    %v228 = vpop.f32.mrb[0].mxu0
    %229 = vmatprep.mubr.bf16.mxu0 0
    %230 = vmatmul.mubr.bf16.gmra.mrb[0].mxu0 %v112
    %v231 = vpop.f32.mrb[0].mxu0
    %v232 = vadd.f32 %v75, %v231
    %v233 = vpop.f32.mrb[0].mxu0
    %v234 = vpop.f32.mrb[0].mxu0
    %v235 = vadd.f32 %v75, %v234
    %v236 = vpop.f32.mrb[0].mxu0
    %237 = vmatprep.mubr.bf16.mxu0 0
    %238 = vmatmul.mubr.bf16.gmra.mrb[0].mxu0 %v113
    %v239 = vpop.f32.mrb[0].mxu0
    %v240 = vadd.f32 %v75, %v239
    %v241 = vpop.f32.mrb[0].mxu0
    %v242 = vpop.f32.mrb[0].mxu0
    %v243 = vadd.f32 %v75, %v242
    %v244 = vpop.f32.mrb[0].mxu0
    %245 = vmatprep.mubr.bf16.mxu0 0
    %246 = vmatmul.mubr.bf16.gmra.mrb[0].mxu0 %v114
    %v247 = vpop.f32.mrb[0].mxu0
    %v248 = vadd.f32 %v75, %v247
    %v249 = vpop.f32.mrb[0].mxu0
    %v250 = vpop.f32.mrb[0].mxu0
    %v251 = vadd.f32 %v75, %v250
    %v252 = vpop.f32.mrb[0].mxu0
    %253 = vmatprep.mubr.bf16.mxu0 0
    %254 = vmatmul.mubr.bf16.gmra.mrb[0].mxu0 %v115
    %v255 = vpop.f32.mrb[0].mxu0
    %v256 = vadd.f32 %v75, %v255
    %v257 = vpop.f32.mrb[0].mxu0
    %v258 = vpop.f32.mrb[0].mxu0
    %v259 = vadd.f32 %v75, %v258
    %v260 = vpop.f32.mrb[0].mxu0
    %261 = vmatprep.mubr.bf16.mxu0 0
    %262 = vmatmul.mubr.bf16.gmra.mrb[0].mxu0 %v116
    %v263 = vpop.f32.mrb[0].mxu0
    %v264 = vadd.f32 %v75, %v263
    %v265 = vpop.f32.mrb[0].mxu0
    %v266 = vpop.f32.mrb[0].mxu0
    %v267 = vadd.f32 %v75, %v266
    %v268 = vpop.f32.mrb[0].mxu0
    %269 = vdwg.mxu0
    %270 = vst [vmem:[#allocation3] sm:$0xff] %v208
    %271 = vst [vmem:[#allocation3 + $0x8] sm:$0xff] %v211
    %272 = vst [vmem:[#allocation3 + $0x10] sm:$0xff] %v216
    %273 = vst [vmem:[#allocation3 + $0x18] sm:$0xff] %v219
    %274 = vst [vmem:[#allocation3 + $0x20] sm:$0xff] %v224
    %275 = vst [vmem:[#allocation3 + $0x28] sm:$0xff] %v227
    %276 = vst [vmem:[#allocation3 + $0x30] sm:$0xff] %v232
    %277 = vst [vmem:[#allocation3 + $0x38] sm:$0xff] %v235
    %278 = vst [vmem:[#allocation3 + $0x40] sm:$0xff] %v240
    %279 = vst [vmem:[#allocation3 + $0x48] sm:$0xff] %v243
    %280 = vst [vmem:[#allocation3 + $0x50] sm:$0xff] %v248
    %281 = vst [vmem:[#allocation3 + $0x58] sm:$0xff] %v251
    %282 = vst [vmem:[#allocation3 + $0x60] sm:$0xff] %v256
    %283 = vst [vmem:[#allocation3 + $0x68] sm:$0xff] %v259
    %284 = vst [vmem:[#allocation3 + $0x70] sm:$0xff] %v264
    %285 = vst [vmem:[#allocation3 + $0x78] sm:$0xff] %v267
    %v286 = vld [vmem:[%s2] sm:$0xf]
    %v287 = vld [vmem:[%s2 + $0x4] sm:$0xf]
    %v288 = vld [vmem:[%s2 + $0x8] sm:$0xf]
    %v289 = vld [vmem:[%s2 + $0xc] sm:$0xf]
    %v290 = vld [vmem:[%s2 + $0x10] sm:$0xf]
    %v291 = vld [vmem:[%s2 + $0x14] sm:$0xf]
    %v292 = vld [vmem:[%s2 + $0x18] sm:$0xf]
    %v293 = vld [vmem:[%s2 + $0x1c] sm:$0xf]
    %v294 = vld [vmem:[%s2 + $0x20] sm:$0xf]
    %v295 = vld [vmem:[%s2 + $0x24] sm:$0xf]
    %v296 = vld [vmem:[%s2 + $0x28] sm:$0xf]
    %v297 = vld [vmem:[%s2 + $0x2c] sm:$0xf]
    %v298 = vld [vmem:[%s2 + $0x30] sm:$0xf]
    %v299 = vld [vmem:[%s2 + $0x34] sm:$0xf]
    %v300 = vld [vmem:[%s2 + $0x38] sm:$0xf]
    %v301 = vld [vmem:[%s2 + $0x3c] sm:$0xf]
    %v302 = vld [vmem:[#allocation2] sm:$0xff]
    %v303 = vld [vmem:[#allocation2 + $0x8] sm:$0xff]
    %v304 = vld [vmem:[#allocation3] sm:$0xff]
    %v305 = vld [vmem:[#allocation3 + $0x8] sm:$0xff]
    %v306 = vpack.c.bf16 %v303, %v302
    %v323 = vunpack.c.l.b16 %v286
    %v324 = vunpack.c.l.b16 %v287
    %v325 = vunpack.c.l.b16 %v288
    %v326 = vunpack.c.l.b16 %v289
    %v327 = vunpack.c.l.b16 %v290
    %v328 = vunpack.c.l.b16 %v291
    %v329 = vunpack.c.l.b16 %v292
    %v330 = vunpack.c.l.b16 %v293
    %v331 = vunpack.c.l.b16 %v294
    %v332 = vunpack.c.l.b16 %v295
    %v333 = vunpack.c.l.b16 %v296
    %v334 = vunpack.c.l.b16 %v297
    %v335 = vunpack.c.l.b16 %v298
    %v336 = vunpack.c.l.b16 %v299
    %v337 = vunpack.c.l.b16 %v300
    %v338 = vunpack.c.l.b16 %v301
    %v339 = vpack.c.b16 %v324, %v323
    %v340 = vpack.c.b16 %v326, %v325
    %v341 = vpack.c.b16 %v328, %v327
    %v342 = vpack.c.b16 %v330, %v329
    %v343 = vpack.c.b16 %v332, %v331
    %v344 = vpack.c.b16 %v334, %v333
    %v345 = vpack.c.b16 %v336, %v335
    %v346 = vpack.c.b16 %v338, %v337
    %355 = vmatprep.subr.bf16.mxu0 0
    %356 = vmatpush1.bf16.msra.mxu0 %v339
    %357 = vmatprep.subr.bf16.mxu0 0
    %358 = vmatpush1.bf16.msra.mxu0 %v340
    %359 = vmatprep.subr.bf16.mxu0 0
    %360 = vmatpush1.bf16.msra.mxu0 %v341
    %361 = vmatprep.subr.bf16.mxu0 0
    %362 = vmatpush1.bf16.msra.mxu0 %v342
    %363 = vmatprep.subr.bf16.mxu0 0
    %364 = vmatpush1.bf16.msra.mxu0 %v343
    %365 = vmatprep.subr.bf16.mxu0 0
    %366 = vmatpush1.bf16.msra.mxu0 %v344
    %367 = vmatprep.subr.bf16.mxu0 0
    %368 = vmatpush1.bf16.msra.mxu0 %v345
    %369 = vmatprep.subr.bf16.mxu0 0
    %370 = vmatpush1.bf16.msra.mxu0 %v346
    %371 = vmatprep.subr.bf16.mxu0 0
    %372 = vmatpush1.bf16.msra.mxu0 0
    %373 = vmatprep.subr.bf16.mxu0 0
    %374 = vmatpush1.bf16.msra.mxu0 0
    %375 = vmatprep.subr.bf16.mxu0 0
    %376 = vmatpush1.bf16.msra.mxu0 0
    %377 = vmatprep.subr.bf16.mxu0 0
    %378 = vmatpush1.bf16.msra.mxu0 0
    %379 = vmatprep.subr.bf16.mxu0 0
    %380 = vmatpush1.bf16.msra.mxu0 0
    %381 = vmatprep.subr.bf16.mxu0 0
    %382 = vmatpush1.bf16.msra.mxu0 0
    %383 = vmatprep.subr.bf16.mxu0 0
    %384 = vmatpush1.bf16.msra.mxu0 0
    %385 = vmatprep.subr.bf16.mxu0 0
    %386 = vmatpush1.bf16.msra.mxu0 0
    %387 = vmatprep.mubr.bf16.mxu0 0
    %388 = vmatmul.mubr.bf16.gmra.mrb[0].mxu0 %v306
    %v389 = vpop.f32.mrb[0].mxu0
    %v390 = vadd.f32 0.0, %v389
    %v391 = vpop.f32.mrb[0].mxu0
    %v392 = vpop.f32.mrb[0].mxu0
    %v393 = vadd.f32 0.0, %v392
    %v394 = vpop.f32.mrb[0].mxu0
    %395 = vdwg.mxu0
    %v396 = vadd.f32 %v304, %v390
    %v397 = vadd.f32 %v305, %v393
    %v398 = vtanh.pop %v396
    %v399 = vtanh.pop %v397
    %v400 = vpack.c.bf16 %v399, %v398
    %v402 = vunpack.c.l.b16 %v400
    %v403 = vunpack.c.h.b16 %v400
    %v404 = vpack.c.b16 %v402, %v402
    %v405 = vpack.c.b16 %v403, %v403
    %408 = vst [vmem:[%s4] sm:$0xf] %v404
    %409 = vst [vmem:[%s4 + $0x4] sm:$0xf] %v405
    %s410 = scalar_lea.vmem [#allocation3], 16
    %v411 = vld [vmem:[%s410] sm:$0xff]
    %v412 = vld [vmem:[%s410 + $0x8] sm:$0xff]
    %413 = vmatprep.subr.bf16.mxu0 0
    %414 = vmatpush1.bf16.msra.mxu0 %v339
    %415 = vmatprep.subr.bf16.mxu0 0
    %416 = vmatpush1.bf16.msra.mxu0 %v340
    %417 = vmatprep.subr.bf16.mxu0 0
    %418 = vmatpush1.bf16.msra.mxu0 %v341
    %419 = vmatprep.subr.bf16.mxu0 0
    %420 = vmatpush1.bf16.msra.mxu0 %v342
    %421 = vmatprep.subr.bf16.mxu0 0
    %422 = vmatpush1.bf16.msra.mxu0 %v343
    %423 = vmatprep.subr.bf16.mxu0 0
    %424 = vmatpush1.bf16.msra.mxu0 %v344
    %425 = vmatprep.subr.bf16.mxu0 0
    %426 = vmatpush1.bf16.msra.mxu0 %v345
    %427 = vmatprep.subr.bf16.mxu0 0
    %428 = vmatpush1.bf16.msra.mxu0 %v346
    %429 = vmatprep.subr.bf16.mxu0 0
    %430 = vmatpush1.bf16.msra.mxu0 0
    %431 = vmatprep.subr.bf16.mxu0 0
    %432 = vmatpush1.bf16.msra.mxu0 0
    %433 = vmatprep.subr.bf16.mxu0 0
    %434 = vmatpush1.bf16.msra.mxu0 0
    %435 = vmatprep.subr.bf16.mxu0 0
    %436 = vmatpush1.bf16.msra.mxu0 0
    %437 = vmatprep.subr.bf16.mxu0 0
    %438 = vmatpush1.bf16.msra.mxu0 0
    %439 = vmatprep.subr.bf16.mxu0 0
    %440 = vmatpush1.bf16.msra.mxu0 0
    %441 = vmatprep.subr.bf16.mxu0 0
    %442 = vmatpush1.bf16.msra.mxu0 0
    %443 = vmatprep.subr.bf16.mxu0 0
    %444 = vmatpush1.bf16.msra.mxu0 0
    %445 = vmatprep.mubr.bf16.mxu0 0
    %446 = vmatmul.mubr.bf16.gmra.mrb[0].mxu0 %v400
    %v447 = vpop.f32.mrb[0].mxu0
    %v448 = vadd.f32 0.0, %v447
    %v449 = vpop.f32.mrb[0].mxu0
    %v450 = vpop.f32.mrb[0].mxu0
    %v451 = vadd.f32 0.0, %v450
    %v452 = vpop.f32.mrb[0].mxu0
    %453 = vdwg.mxu0
    %v454 = vadd.f32 %v411, %v448
    %v455 = vadd.f32 %v412, %v451
    %v456 = vtanh.pop %v454
    %v457 = vtanh.pop %v455
    %v458 = vpack.c.bf16 %v457, %v456
    %v460 = vunpack.c.l.b16 %v458
    %v461 = vunpack.c.h.b16 %v458
    %v462 = vpack.c.b16 %v460, %v460
    %v463 = vpack.c.b16 %v461, %v461
    %s466 = scalar_lea.vmem %s4, 8
    %467 = vst [vmem:[%s466] sm:$0xf] %v462
    %468 = vst [vmem:[%s466 + $0x4] sm:$0xf] %v463
    %s469 = scalar_lea.vmem [#allocation3], 32
    %v470 = vld [vmem:[%s469] sm:$0xff]
    %v471 = vld [vmem:[%s469 + $0x8] sm:$0xff]
    %472 = vmatprep.subr.bf16.mxu0 0
    %473 = vmatpush1.bf16.msra.mxu0 %v339
    %474 = vmatprep.subr.bf16.mxu0 0
    %475 = vmatpush1.bf16.msra.mxu0 %v340
    %476 = vmatprep.subr.bf16.mxu0 0
    %477 = vmatpush1.bf16.msra.mxu0 %v341
    %478 = vmatprep.subr.bf16.mxu0 0
    %479 = vmatpush1.bf16.msra.mxu0 %v342
    %480 = vmatprep.subr.bf16.mxu0 0
    %481 = vmatpush1.bf16.msra.mxu0 %v343
    %482 = vmatprep.subr.bf16.mxu0 0
    %483 = vmatpush1.bf16.msra.mxu0 %v344
    %484 = vmatprep.subr.bf16.mxu0 0
    %485 = vmatpush1.bf16.msra.mxu0 %v345
    %486 = vmatprep.subr.bf16.mxu0 0
    %487 = vmatpush1.bf16.msra.mxu0 %v346
    %488 = vmatprep.subr.bf16.mxu0 0
    %489 = vmatpush1.bf16.msra.mxu0 0
    %490 = vmatprep.subr.bf16.mxu0 0
    %491 = vmatpush1.bf16.msra.mxu0 0
    %492 = vmatprep.subr.bf16.mxu0 0
    %493 = vmatpush1.bf16.msra.mxu0 0
    %494 = vmatprep.subr.bf16.mxu0 0
    %495 = vmatpush1.bf16.msra.mxu0 0
    %496 = vmatprep.subr.bf16.mxu0 0
    %497 = vmatpush1.bf16.msra.mxu0 0
    %498 = vmatprep.subr.bf16.mxu0 0
    %499 = vmatpush1.bf16.msra.mxu0 0
    %500 = vmatprep.subr.bf16.mxu0 0
    %501 = vmatpush1.bf16.msra.mxu0 0
    %502 = vmatprep.subr.bf16.mxu0 0
    %503 = vmatpush1.bf16.msra.mxu0 0
    %504 = vmatprep.mubr.bf16.mxu0 0
    %505 = vmatmul.mubr.bf16.gmra.mrb[0].mxu0 %v458
    %v506 = vpop.f32.mrb[0].mxu0
    %v507 = vadd.f32 0.0, %v506
    %v508 = vpop.f32.mrb[0].mxu0
    %v509 = vpop.f32.mrb[0].mxu0
    %v510 = vadd.f32 0.0, %v509
    %v511 = vpop.f32.mrb[0].mxu0
    %512 = vdwg.mxu0
    %v513 = vadd.f32 %v470, %v507
    %v514 = vadd.f32 %v471, %v510
    %v515 = vtanh.pop %v513
    %v516 = vtanh.pop %v514
    %v517 = vpack.c.bf16 %v516, %v515
    %v519 = vunpack.c.l.b16 %v517
    %v520 = vunpack.c.h.b16 %v517
    %v521 = vpack.c.b16 %v519, %v519
    %v522 = vpack.c.b16 %v520, %v520
    %s525 = scalar_lea.vmem %s4, 16
    %526 = vst [vmem:[%s525] sm:$0xf] %v521
    %527 = vst [vmem:[%s525 + $0x4] sm:$0xf] %v522
    %s528 = scalar_lea.vmem [#allocation3], 48
    %v529 = vld [vmem:[%s528] sm:$0xff]
    %v530 = vld [vmem:[%s528 + $0x8] sm:$0xff]
    %531 = vmatprep.subr.bf16.mxu0 0
    %532 = vmatpush1.bf16.msra.mxu0 %v339
    %533 = vmatprep.subr.bf16.mxu0 0
    %534 = vmatpush1.bf16.msra.mxu0 %v340
    %535 = vmatprep.subr.bf16.mxu0 0
    %536 = vmatpush1.bf16.msra.mxu0 %v341
    %537 = vmatprep.subr.bf16.mxu0 0
    %538 = vmatpush1.bf16.msra.mxu0 %v342
    %539 = vmatprep.subr.bf16.mxu0 0
    %540 = vmatpush1.bf16.msra.mxu0 %v343
    %541 = vmatprep.subr.bf16.mxu0 0
    %542 = vmatpush1.bf16.msra.mxu0 %v344
    %543 = vmatprep.subr.bf16.mxu0 0
    %544 = vmatpush1.bf16.msra.mxu0 %v345
    %545 = vmatprep.subr.bf16.mxu0 0
    %546 = vmatpush1.bf16.msra.mxu0 %v346
    %547 = vmatprep.subr.bf16.mxu0 0
    %548 = vmatpush1.bf16.msra.mxu0 0
    %549 = vmatprep.subr.bf16.mxu0 0
    %550 = vmatpush1.bf16.msra.mxu0 0
    %551 = vmatprep.subr.bf16.mxu0 0
    %552 = vmatpush1.bf16.msra.mxu0 0
    %553 = vmatprep.subr.bf16.mxu0 0
    %554 = vmatpush1.bf16.msra.mxu0 0
    %555 = vmatprep.subr.bf16.mxu0 0
    %556 = vmatpush1.bf16.msra.mxu0 0
    %557 = vmatprep.subr.bf16.mxu0 0
    %558 = vmatpush1.bf16.msra.mxu0 0
    %559 = vmatprep.subr.bf16.mxu0 0
    %560 = vmatpush1.bf16.msra.mxu0 0
    %561 = vmatprep.subr.bf16.mxu0 0
    %562 = vmatpush1.bf16.msra.mxu0 0
    %563 = vmatprep.mubr.bf16.mxu0 0
    %564 = vmatmul.mubr.bf16.gmra.mrb[0].mxu0 %v517
    %v565 = vpop.f32.mrb[0].mxu0
    %v566 = vadd.f32 0.0, %v565
    %v567 = vpop.f32.mrb[0].mxu0
    %v568 = vpop.f32.mrb[0].mxu0
    %v569 = vadd.f32 0.0, %v568
    %v570 = vpop.f32.mrb[0].mxu0
    %571 = vdwg.mxu0
    %v572 = vadd.f32 %v529, %v566
    %v573 = vadd.f32 %v530, %v569
    %v574 = vtanh.pop %v572
    %v575 = vtanh.pop %v573
    %v576 = vpack.c.bf16 %v575, %v574
    %v578 = vunpack.c.l.b16 %v576
    %v579 = vunpack.c.h.b16 %v576
    %v580 = vpack.c.b16 %v578, %v578
    %v581 = vpack.c.b16 %v579, %v579
    %s584 = scalar_lea.vmem %s4, 24
    %585 = vst [vmem:[%s584] sm:$0xf] %v580
    %586 = vst [vmem:[%s584 + $0x4] sm:$0xf] %v581
    %s587 = scalar_lea.vmem [#allocation3], 64
    %v588 = vld [vmem:[%s587] sm:$0xff]
    %v589 = vld [vmem:[%s587 + $0x8] sm:$0xff]
    %590 = vmatprep.subr.bf16.mxu0 0
    %591 = vmatpush1.bf16.msra.mxu0 %v339
    %592 = vmatprep.subr.bf16.mxu0 0
    %593 = vmatpush1.bf16.msra.mxu0 %v340
    %594 = vmatprep.subr.bf16.mxu0 0
    %595 = vmatpush1.bf16.msra.mxu0 %v341
    %596 = vmatprep.subr.bf16.mxu0 0
    %597 = vmatpush1.bf16.msra.mxu0 %v342
    %598 = vmatprep.subr.bf16.mxu0 0
    %599 = vmatpush1.bf16.msra.mxu0 %v343
    %600 = vmatprep.subr.bf16.mxu0 0
    %601 = vmatpush1.bf16.msra.mxu0 %v344
    %602 = vmatprep.subr.bf16.mxu0 0
    %603 = vmatpush1.bf16.msra.mxu0 %v345
    %604 = vmatprep.subr.bf16.mxu0 0
    %605 = vmatpush1.bf16.msra.mxu0 %v346
    %606 = vmatprep.subr.bf16.mxu0 0
    %607 = vmatpush1.bf16.msra.mxu0 0
    %608 = vmatprep.subr.bf16.mxu0 0
    %609 = vmatpush1.bf16.msra.mxu0 0
    %610 = vmatprep.subr.bf16.mxu0 0
    %611 = vmatpush1.bf16.msra.mxu0 0
    %612 = vmatprep.subr.bf16.mxu0 0
    %613 = vmatpush1.bf16.msra.mxu0 0
    %614 = vmatprep.subr.bf16.mxu0 0
    %615 = vmatpush1.bf16.msra.mxu0 0
    %616 = vmatprep.subr.bf16.mxu0 0
    %617 = vmatpush1.bf16.msra.mxu0 0
    %618 = vmatprep.subr.bf16.mxu0 0
    %619 = vmatpush1.bf16.msra.mxu0 0
    %620 = vmatprep.subr.bf16.mxu0 0
    %621 = vmatpush1.bf16.msra.mxu0 0
    %622 = vmatprep.mubr.bf16.mxu0 0
    %623 = vmatmul.mubr.bf16.gmra.mrb[0].mxu0 %v576
    %v624 = vpop.f32.mrb[0].mxu0
    %v625 = vadd.f32 0.0, %v624
    %v626 = vpop.f32.mrb[0].mxu0
    %v627 = vpop.f32.mrb[0].mxu0
    %v628 = vadd.f32 0.0, %v627
    %v629 = vpop.f32.mrb[0].mxu0
    %630 = vdwg.mxu0
    %v631 = vadd.f32 %v588, %v625
    %v632 = vadd.f32 %v589, %v628
    %v633 = vtanh.pop %v631
    %v634 = vtanh.pop %v632
    %v635 = vpack.c.bf16 %v634, %v633
    %v637 = vunpack.c.l.b16 %v635
    %v638 = vunpack.c.h.b16 %v635
    %v639 = vpack.c.b16 %v637, %v637
    %v640 = vpack.c.b16 %v638, %v638
    %s643 = scalar_lea.vmem %s4, 32
    %644 = vst [vmem:[%s643] sm:$0xf] %v639
    %645 = vst [vmem:[%s643 + $0x4] sm:$0xf] %v640
    %s646 = scalar_lea.vmem [#allocation3], 80
    %v647 = vld [vmem:[%s646] sm:$0xff]
    %v648 = vld [vmem:[%s646 + $0x8] sm:$0xff]
    %649 = vmatprep.subr.bf16.mxu0 0
    %650 = vmatpush1.bf16.msra.mxu0 %v339
    %651 = vmatprep.subr.bf16.mxu0 0
    %652 = vmatpush1.bf16.msra.mxu0 %v340
    %653 = vmatprep.subr.bf16.mxu0 0
    %654 = vmatpush1.bf16.msra.mxu0 %v341
    %655 = vmatprep.subr.bf16.mxu0 0
    %656 = vmatpush1.bf16.msra.mxu0 %v342
    %657 = vmatprep.subr.bf16.mxu0 0
    %658 = vmatpush1.bf16.msra.mxu0 %v343
    %659 = vmatprep.subr.bf16.mxu0 0
    %660 = vmatpush1.bf16.msra.mxu0 %v344
    %661 = vmatprep.subr.bf16.mxu0 0
    %662 = vmatpush1.bf16.msra.mxu0 %v345
    %663 = vmatprep.subr.bf16.mxu0 0
    %664 = vmatpush1.bf16.msra.mxu0 %v346
    %665 = vmatprep.subr.bf16.mxu0 0
    %666 = vmatpush1.bf16.msra.mxu0 0
    %667 = vmatprep.subr.bf16.mxu0 0
    %668 = vmatpush1.bf16.msra.mxu0 0
    %669 = vmatprep.subr.bf16.mxu0 0
    %670 = vmatpush1.bf16.msra.mxu0 0
    %671 = vmatprep.subr.bf16.mxu0 0
    %672 = vmatpush1.bf16.msra.mxu0 0
    %673 = vmatprep.subr.bf16.mxu0 0
    %674 = vmatpush1.bf16.msra.mxu0 0
    %675 = vmatprep.subr.bf16.mxu0 0
    %676 = vmatpush1.bf16.msra.mxu0 0
    %677 = vmatprep.subr.bf16.mxu0 0
    %678 = vmatpush1.bf16.msra.mxu0 0
    %679 = vmatprep.subr.bf16.mxu0 0
    %680 = vmatpush1.bf16.msra.mxu0 0
    %681 = vmatprep.mubr.bf16.mxu0 0
    %682 = vmatmul.mubr.bf16.gmra.mrb[0].mxu0 %v635
    %v683 = vpop.f32.mrb[0].mxu0
    %v684 = vadd.f32 0.0, %v683
    %v685 = vpop.f32.mrb[0].mxu0
    %v686 = vpop.f32.mrb[0].mxu0
    %v687 = vadd.f32 0.0, %v686
    %v688 = vpop.f32.mrb[0].mxu0
    %689 = vdwg.mxu0
    %v690 = vadd.f32 %v647, %v684
    %v691 = vadd.f32 %v648, %v687
    %v692 = vtanh.pop %v690
    %v693 = vtanh.pop %v691
    %v694 = vpack.c.bf16 %v693, %v692
    %v696 = vunpack.c.l.b16 %v694
    %v697 = vunpack.c.h.b16 %v694
    %v698 = vpack.c.b16 %v696, %v696
    %v699 = vpack.c.b16 %v697, %v697
    %s702 = scalar_lea.vmem %s4, 40
    %703 = vst [vmem:[%s702] sm:$0xf] %v698
    %704 = vst [vmem:[%s702 + $0x4] sm:$0xf] %v699
    %s705 = scalar_lea.vmem [#allocation3], 96
    %v706 = vld [vmem:[%s705] sm:$0xff]
    %v707 = vld [vmem:[%s705 + $0x8] sm:$0xff]
    %708 = vmatprep.subr.bf16.mxu0 0
    %709 = vmatpush1.bf16.msra.mxu0 %v339
    %710 = vmatprep.subr.bf16.mxu0 0
    %711 = vmatpush1.bf16.msra.mxu0 %v340
    %712 = vmatprep.subr.bf16.mxu0 0
    %713 = vmatpush1.bf16.msra.mxu0 %v341
    %714 = vmatprep.subr.bf16.mxu0 0
    %715 = vmatpush1.bf16.msra.mxu0 %v342
    %716 = vmatprep.subr.bf16.mxu0 0
    %717 = vmatpush1.bf16.msra.mxu0 %v343
    %718 = vmatprep.subr.bf16.mxu0 0
    %719 = vmatpush1.bf16.msra.mxu0 %v344
    %720 = vmatprep.subr.bf16.mxu0 0
    %721 = vmatpush1.bf16.msra.mxu0 %v345
    %722 = vmatprep.subr.bf16.mxu0 0
    %723 = vmatpush1.bf16.msra.mxu0 %v346
    %724 = vmatprep.subr.bf16.mxu0 0
    %725 = vmatpush1.bf16.msra.mxu0 0
    %726 = vmatprep.subr.bf16.mxu0 0
    %727 = vmatpush1.bf16.msra.mxu0 0
    %728 = vmatprep.subr.bf16.mxu0 0
    %729 = vmatpush1.bf16.msra.mxu0 0
    %730 = vmatprep.subr.bf16.mxu0 0
    %731 = vmatpush1.bf16.msra.mxu0 0
    %732 = vmatprep.subr.bf16.mxu0 0
    %733 = vmatpush1.bf16.msra.mxu0 0
    %734 = vmatprep.subr.bf16.mxu0 0
    %735 = vmatpush1.bf16.msra.mxu0 0
    %736 = vmatprep.subr.bf16.mxu0 0
    %737 = vmatpush1.bf16.msra.mxu0 0
    %738 = vmatprep.subr.bf16.mxu0 0
    %739 = vmatpush1.bf16.msra.mxu0 0
    %740 = vmatprep.mubr.bf16.mxu0 0
    %741 = vmatmul.mubr.bf16.gmra.mrb[0].mxu0 %v694
    %v742 = vpop.f32.mrb[0].mxu0
    %v743 = vadd.f32 0.0, %v742
    %v744 = vpop.f32.mrb[0].mxu0
    %v745 = vpop.f32.mrb[0].mxu0
    %v746 = vadd.f32 0.0, %v745
    %v747 = vpop.f32.mrb[0].mxu0
    %748 = vdwg.mxu0
    %v749 = vadd.f32 %v706, %v743
    %v750 = vadd.f32 %v707, %v746
    %v751 = vtanh.pop %v749
    %v752 = vtanh.pop %v750
    %v753 = vpack.c.bf16 %v752, %v751
    %v755 = vunpack.c.l.b16 %v753
    %v756 = vunpack.c.h.b16 %v753
    %v757 = vpack.c.b16 %v755, %v755
    %v758 = vpack.c.b16 %v756, %v756
    %s761 = scalar_lea.vmem %s4, 48
    %762 = vst [vmem:[%s761] sm:$0xf] %v757
    %763 = vst [vmem:[%s761 + $0x4] sm:$0xf] %v758
    %s764 = scalar_lea.vmem [#allocation3], 112
    %v765 = vld [vmem:[%s764] sm:$0xff]
    %v766 = vld [vmem:[%s764 + $0x8] sm:$0xff]
    %767 = vmatprep.subr.bf16.mxu0 0
    %768 = vmatpush1.bf16.msra.mxu0 %v339
    %769 = vmatprep.subr.bf16.mxu0 0
    %770 = vmatpush1.bf16.msra.mxu0 %v340
    %771 = vmatprep.subr.bf16.mxu0 0
    %772 = vmatpush1.bf16.msra.mxu0 %v341
    %773 = vmatprep.subr.bf16.mxu0 0
    %774 = vmatpush1.bf16.msra.mxu0 %v342
    %775 = vmatprep.subr.bf16.mxu0 0
    %776 = vmatpush1.bf16.msra.mxu0 %v343
    %777 = vmatprep.subr.bf16.mxu0 0
    %778 = vmatpush1.bf16.msra.mxu0 %v344
    %779 = vmatprep.subr.bf16.mxu0 0
    %780 = vmatpush1.bf16.msra.mxu0 %v345
    %781 = vmatprep.subr.bf16.mxu0 0
    %782 = vmatpush1.bf16.msra.mxu0 %v346
    %783 = vmatprep.subr.bf16.mxu0 0
    %784 = vmatpush1.bf16.msra.mxu0 0
    %785 = vmatprep.subr.bf16.mxu0 0
    %786 = vmatpush1.bf16.msra.mxu0 0
    %787 = vmatprep.subr.bf16.mxu0 0
    %788 = vmatpush1.bf16.msra.mxu0 0
    %789 = vmatprep.subr.bf16.mxu0 0
    %790 = vmatpush1.bf16.msra.mxu0 0
    %791 = vmatprep.subr.bf16.mxu0 0
    %792 = vmatpush1.bf16.msra.mxu0 0
    %793 = vmatprep.subr.bf16.mxu0 0
    %794 = vmatpush1.bf16.msra.mxu0 0
    %795 = vmatprep.subr.bf16.mxu0 0
    %796 = vmatpush1.bf16.msra.mxu0 0
    %797 = vmatprep.subr.bf16.mxu0 0
    %798 = vmatpush1.bf16.msra.mxu0 0
    %799 = vmatprep.mubr.bf16.mxu0 0
    %800 = vmatmul.mubr.bf16.gmra.mrb[0].mxu0 %v753
    %v801 = vpop.f32.mrb[0].mxu0
    %v802 = vadd.f32 0.0, %v801
    %v803 = vpop.f32.mrb[0].mxu0
    %v804 = vpop.f32.mrb[0].mxu0
    %v805 = vadd.f32 0.0, %v804
    %v806 = vpop.f32.mrb[0].mxu0
    %807 = vdwg.mxu0
    %v808 = vadd.f32 %v765, %v802
    %v809 = vadd.f32 %v766, %v805
    %v810 = vtanh.pop %v808
    %v811 = vtanh.pop %v809
    %v812 = vpack.c.bf16 %v811, %v810
    %v814 = vunpack.c.l.b16 %v812
    %v815 = vunpack.c.h.b16 %v812
    %v816 = vpack.c.b16 %v814, %v814
    %v817 = vpack.c.b16 %v815, %v815
    %s820 = scalar_lea.vmem %s4, 56
    %821 = vst [vmem:[%s820] sm:$0xf] %v816
    %822 = vst [vmem:[%s820 + $0x4] sm:$0xf] %v817
    %823 = vst [vmem:[#allocation2] sm:$0xff] %v810
    %824 = vst [vmem:[#allocation2 + $0x8] sm:$0xff] %v811
    // Predicated region
    $region26: #{a_call__.2} parent=1 // pred_check
      _
    $region27: #{a_call__.2} parent=1 // pred_check_branch
      %826 = sbr.rel (0) target = $region29
    $region28: #{a_call__.2} parent=1 // pred_region
      _
    $region29: #{a_call__.2} parent=1 // pred_fallthru
      _
    // Predicated region
    $region30: #{a_call__.2} parent=1 // pred_check
      _
    $region31: #{a_call__.2} parent=1 // pred_check_branch
      %828 = sbr.rel (0) target = $region33
    $region32: #{a_call__.2} parent=1 // pred_region
      _
    $region33: #{a_call__.2} parent=1 // pred_fallthru
      _
    %829 = vsyncpa [#allocation5], 1

</llo_original>
